<compile_context>
chip_gen: v7x
topology: tpu7x:2x2x1
jax: 0.10.0
libtpu: 0.0.40
codegen_flags: <defaults>
</compile_context>

<pallas_src>
import functools
import math

import jax
import jax.numpy as jnp
from jax import lax
from jax.experimental import pallas as pl
from jax.experimental.pallas import tpu as pltpu


def _is_pow2(n):
    return n > 0 and (n & (n - 1)) == 0


def _spatial_transformer_kernel(flow_ref, src_ref, out_ref, lhs_ref, *, H, W, NB, C, QT):
    """Warps NB samples. Blocks: flow (NB,2,HW), src (NB,C,HW), out (NB,C,HW).

    lhs_ref: VMEM scratch (8*C, HW) f32 holding the stacked 4-tap LHS (hi/lo split).
    """
    HW = H * W
    q_offsets = list(range(0, HW, QT))                       # static chunking of q axis

    # Invariant iota for the one-hot build: computed once per grid step (shared by all
    # NB samples and all q-chunks).  Not hoisted into a persistent scratch because with
    # "parallel" megacore sharding a pl.when(program_id==0) init is not seen by core 1.
    q_iota = lax.broadcasted_iota(jnp.int32, (QT, HW), 0)

    # Output pixel coordinates p = h*W + w (strength-reduced when W is a power of two).
    p = lax.broadcasted_iota(jnp.int32, (1, HW), 1)
    if _is_pow2(W):
        hh = (p >> int(math.log2(W))).astype(jnp.float32)
        ww = (p & (W - 1)).astype(jnp.float32)
    else:
        hh = (p // W).astype(jnp.float32)
        ww = (p % W).astype(jnp.float32)

    for i in range(NB):                                      # static, unrolled
        src = src_ref[i]                                     # (C, HW) f32
        flow = flow_ref[i]                                   # (2, HW) f32
        dy = flow[0:1, :]                                    # displacement along H
        dx = flow[1:2, :]                                    # displacement along W

        # Un-normalized sample locations (identical to grid + flow in the module).
        y = hh + dy
        x = ww + dx
        y0f = jnp.floor(y)
        x0f = jnp.floor(x)
        wy1 = y - y0f
        wy0 = 1.0 - wy1
        wx1 = x - x0f
        wx0 = 1.0 - wx1
        y0 = y0f.astype(jnp.int32)
        x0 = x0f.astype(jnp.int32)
        y1 = y0 + 1
        x1 = x0 + 1

        # Per-tap bilinear weights with the zero-padding validity mask folded in.
        def tap_weight(yi, xi, w):
            valid = (yi >= 0) & (yi <= H - 1) & (xi >= 0) & (xi <= W - 1)
            return jnp.where(valid, w, 0.0)

        w_taps = (tap_weight(y0, x0, wy0 * wx0),
                  tap_weight(y0, x1, wy0 * wx1),
                  tap_weight(y1, x0, wy1 * wx0),
                  tap_weight(y1, x1, wy1 * wx1))

        # Base source index for the (y0, x0) tap, reduced mod HW.  Valid taps only need
        # a single +HW correction; far-out-of-range columns carry zero weight, so a
        # clip is safe there.
        base = y0 * W + x0
        if _is_pow2(HW):
            base = base & (HW - 1)
        else:
            base = jnp.where(base < 0, base + HW, base)
            base = jnp.clip(base, 0, HW - 1)

        # The four taps as circular rolls of the source pixel axis (XLU, cheap):
        # src_off[c, q] == src[c, (q + off) mod HW] for off = 0, +1, +W, +W+1.
        taps = (src,
                pltpu.roll(src, shift=HW - 1, axis=1),       # +1     -> tap (y0, x1)
                pltpu.roll(src, shift=HW - W, axis=1),       # +W     -> tap (y1, x0)
                pltpu.roll(src, shift=HW - W - 1, axis=1))   # +W + 1 -> tap (y1, x1)

        # Stack the taps into ONE (8C, HW) LHS.  hi = bf16-rounded values (exactly
        # representable in bf16), lo = f32 residual; hi[q] + lo[q] reproduces src[q] to
        # ~2^-18 relative error regardless of the MXU's internal operand precision.
        for t, s in enumerate(taps):
            hi = s.astype(jnp.bfloat16).astype(jnp.float32)
            lhs_ref[t * C:(t + 1) * C, :] = hi
            lhs_ref[(4 + t) * C:(5 + t) * C, :] = s - hi

        # Single fused one-hot matmul, q-chunked so only a (QT, HW) slab of the one-hot
        # is ever live.  The RHS is streamed through the MXU once per sample.
        acc = None
        for qoff in q_offsets:
            qt = min(QT, HW - qoff)
            e = jnp.where(q_iota[:qt] == (base - qoff), 1.0, 0.0)      # (qt, HW) f32
            part = jnp.dot(lhs_ref[:, qoff:qoff + qt], e,
                           preferred_element_type=jnp.float32)         # (8C, HW)
            acc = part if acc is None else acc + part

        # Recombine hi + lo per tap and apply the (masked) bilinear weights.
        out = (acc[0:C] + acc[4 * C:5 * C]) * w_taps[0]
        for t in range(1, 4):
            sel = acc[t * C:(t + 1) * C] + acc[(4 + t) * C:(5 + t) * C]
            out = out + sel * w_taps[t]

        out_ref[i] = out.astype(out_ref.dtype)


def spatial_transformer(src, flow, *, samples_per_step=4, q_chunk=512):
    """SpatialTransformer.forward for 2-D inputs (bilinear, align_corners=True)."""
    N, C, H, W = src.shape
    assert flow.shape == (N, 2, H, W), "flow must be (N, 2, H, W)"
    HW = H * W
    # q-chunking bounds the transient one-hot at QT*HW*4 B, but the (8C,HW) scratch,
    # the chunk iota and the O(HW^2) MXU work still cap the practical image size here.
    assert HW <= 4096, "chunked one-hot warp supports H*W <= 4096"
    # TODO(synk): for larger images switch to a DMA/gather-based tap fetch instead of
    #             the one-hot matmul.
    # TODO(synk): mode='nearest' and the 3-D (D, H, W) branch of grid_sample are not
    #             implemented; only the 2-D bilinear path of the module is covered.
    # TODO(synk): add a second "parallel" grid axis over output-pixel blocks so N==1
    #             calls still occupy both TensorCores on v7x.

    # Batch NB samples per grid step (largest divisor of N not exceeding the target).
    NB = max(d for d in range(1, min(samples_per_step, N) + 1) if N % d == 0)
    QT = min(q_chunk, HW)

    src_flat = src.astype(jnp.float32).reshape(N, C, HW)
    flow_flat = flow.astype(jnp.float32).reshape(N, 2, HW)

    # Explicit VMEM budget (v5e's default scoped limit is only 16 MiB): double-buffered
    # I/O blocks + stacked-LHS scratch + chunk transients (iota, one-hot, accumulator).
    io_bytes = 2 * 4 * NB * HW * (2 + C + C)
    scratch_bytes = 8 * C * HW * 4
    transient_bytes = 2 * QT * HW * 4 + 3 * (8 * C * HW * 4)
    vmem_limit = int(min(64 * 2 ** 20,
                         max(32 * 2 ** 20,
                             2 * (io_bytes + scratch_bytes + transient_bytes))))

    kernel = functools.partial(_spatial_transformer_kernel,
                               H=H, W=W, NB=NB, C=C, QT=QT)
    out = pl.pallas_call(
        kernel,
        out_shape=jax.ShapeDtypeStruct((N, C, HW), jnp.float32),
        grid=(N // NB,),
        in_specs=[pl.BlockSpec((NB, 2, HW), lambda n: (n, 0, 0)),
                  pl.BlockSpec((NB, C, HW), lambda n: (n, 0, 0))],
        out_specs=pl.BlockSpec((NB, C, HW), lambda n: (n, 0, 0)),
        scratch_shapes=[pltpu.VMEM((8 * C, HW), jnp.float32)],
        compiler_params=pltpu.CompilerParams(
            dimension_semantics=("parallel",),
            vmem_limit_bytes=vmem_limit),
    )(flow_flat, src_flat)

    return out.reshape(N, C, H, W)


# ----------------------- pure-JAX reference (for verification) -----------------------
def _spatial_transformer_ref(src, flow):
    N, C, H, W = src.shape
    hh, ww = jnp.meshgrid(jnp.arange(H, dtype=jnp.float32),
                          jnp.arange(W, dtype=jnp.float32), indexing="ij")

    def warp_one(s, f):  # s: (C, H, W), f: (2, H, W)
        y = hh + f[0]
        x = ww + f[1]
        y0f = jnp.floor(y)
        x0f = jnp.floor(x)
        wy1 = y - y0f
        wy0 = 1.0 - wy1
        wx1 = x - x0f
        wx0 = 1.0 - wx1
        y0 = y0f.astype(jnp.int32)
        x0 = x0f.astype(jnp.int32)
        y1 = y0 + 1
        x1 = x0 + 1
        out = jnp.zeros_like(s)
        for yi, xi, wgt in ((y0, x0, wy0 * wx0), (y0, x1, wy0 * wx1),
                            (y1, x0, wy1 * wx0), (y1, x1, wy1 * wx1)):
            valid = (yi >= 0) & (yi < H) & (xi >= 0) & (xi < W)
            v = s[:, jnp.clip(yi, 0, H - 1), jnp.clip(xi, 0, W - 1)]
            out = out + v * jnp.where(valid, wgt, 0.0)[None]
        return out

    return jax.vmap(warp_one)(src.astype(jnp.float32), flow.astype(jnp.float32))


if __name__ == "__main__":
    key = jax.random.PRNGKey(0)
    k_src, k_flow = jax.random.split(key)
    N, C, H, W = 2, 4, 16, 16
    src = jax.random.normal(k_src, (N, C, H, W), dtype=jnp.float32)
    # a few pixels of displacement; some sample points leave the image (zero-padding path)
    flow = 3.0 * jax.random.normal(k_flow, (N, 2, H, W), dtype=jnp.float32)

    out = jax.block_until_ready(spatial_transformer(src, flow))
    ref = jax.block_until_ready(_spatial_transformer_ref(src, flow))

    assert out.shape == (N, C, H, W)
    err = float(jnp.max(jnp.abs(out - ref)))
    assert jnp.allclose(out, ref, rtol=1e-4, atol=1e-4), err
    print("KERNEL_OK")
</pallas_src>

<mosaic_0001>
module attributes {stable_mosaic.version = 11 : i64} {
  func.func @_spatial_transformer_kernel(%arg0: i32, %arg1: memref<2x2x256xf32, #tpu.memory_space<vmem>>, %arg2: memref<2x4x256xf32, #tpu.memory_space<vmem>>, %arg3: memref<2x4x256xf32, #tpu.memory_space<vmem>>, %arg4: memref<32x256xf32, #tpu.memory_space<vmem>>) attributes {dimension_semantics = [#tpu.dimension_semantics<parallel>], iteration_bounds = array<i64: 1>, scalar_prefetch = 0 : i64, scratch_operands = 1 : i64, tpu.core_type = #tpu.core_type<tc>, window_params = [{transform_indices = @transform_0, window_bounds = array<i64: 2, 2, 256>}, {transform_indices = @transform_1, window_bounds = array<i64: 2, 4, 256>}, {transform_indices = @transform_2, window_bounds = array<i64: 2, 4, 256>}]} {
    %0 = tpu.iota {dimensions = array<i32: 0>} : vector<256x256xi32>
    %1 = tpu.iota {dimensions = array<i32: 1>} : vector<1x256xi32>
    %c4_i32 = arith.constant 4 : i32
    %2 = vector.broadcast %c4_i32 : i32 to vector<1x256xi32>
    %3 = arith.shrsi %1, %2 : vector<1x256xi32>
    %4 = arith.sitofp %3 : vector<1x256xi32> to vector<1x256xf32>
    %c15_i32 = arith.constant 15 : i32
    %5 = vector.broadcast %c15_i32 : i32 to vector<1x256xi32>
    %6 = arith.andi %1, %5 : vector<1x256xi32>
    %7 = arith.sitofp %6 : vector<1x256xi32> to vector<1x256xf32>
    %c0 = arith.constant 0 : index
    %c0_0 = arith.constant 0 : index
    %c0_1 = arith.constant 0 : index
    %8 = vector.load %arg2[%c0, %c0_0, %c0_1] : memref<2x4x256xf32, #tpu.memory_space<vmem>>, vector<1x4x256xf32>
    %9 = vector.shape_cast %8 : vector<1x4x256xf32> to vector<4x256xf32>
    %c0_2 = arith.constant 0 : index
    %c0_3 = arith.constant 0 : index
    %c0_4 = arith.constant 0 : index
    %10 = vector.load %arg1[%c0_2, %c0_3, %c0_4] : memref<2x2x256xf32, #tpu.memory_space<vmem>>, vector<1x2x256xf32>
    %11 = vector.shape_cast %10 : vector<1x2x256xf32> to vector<2x256xf32>
    %12 = vector.extract_strided_slice %11 {offsets = [0, 0], sizes = [1, 256], strides = [1, 1]} : vector<2x256xf32> to vector<1x256xf32>
    %13 = vector.extract_strided_slice %11 {offsets = [1, 0], sizes = [1, 256], strides = [1, 1]} : vector<2x256xf32> to vector<1x256xf32>
    %14 = arith.addf %4, %12 : vector<1x256xf32>
    %15 = arith.addf %7, %13 : vector<1x256xf32>
    %16 = math.floor %14 : vector<1x256xf32>
    %17 = math.floor %15 : vector<1x256xf32>
    %18 = arith.subf %14, %16 : vector<1x256xf32>
    %cst = arith.constant 1.000000e+00 : f32
    %19 = vector.broadcast %cst : f32 to vector<1x256xf32>
    %20 = arith.subf %19, %18 : vector<1x256xf32>
    %21 = arith.subf %15, %17 : vector<1x256xf32>
    %cst_5 = arith.constant 1.000000e+00 : f32
    %22 = vector.broadcast %cst_5 : f32 to vector<1x256xf32>
    %23 = arith.subf %22, %21 : vector<1x256xf32>
    %24 = arith.fptosi %16 : vector<1x256xf32> to vector<1x256xi32>
    %25 = arith.fptosi %17 : vector<1x256xf32> to vector<1x256xi32>
    %c1_i32 = arith.constant 1 : i32
    %26 = vector.broadcast %c1_i32 : i32 to vector<1x256xi32>
    %27 = arith.addi %24, %26 : vector<1x256xi32>
    %c1_i32_6 = arith.constant 1 : i32
    %28 = vector.broadcast %c1_i32_6 : i32 to vector<1x256xi32>
    %29 = arith.addi %25, %28 : vector<1x256xi32>
    %30 = arith.mulf %20, %23 : vector<1x256xf32>
    %c0_i32 = arith.constant 0 : i32
    %31 = vector.broadcast %c0_i32 : i32 to vector<1x256xi32>
    %32 = arith.cmpi sge, %24, %31 : vector<1x256xi32>
    %c15_i32_7 = arith.constant 15 : i32
    %33 = vector.broadcast %c15_i32_7 : i32 to vector<1x256xi32>
    %34 = arith.cmpi sle, %24, %33 : vector<1x256xi32>
    %35 = arith.andi %32, %34 : vector<1x256xi1>
    %c0_i32_8 = arith.constant 0 : i32
    %36 = vector.broadcast %c0_i32_8 : i32 to vector<1x256xi32>
    %37 = arith.cmpi sge, %25, %36 : vector<1x256xi32>
    %38 = arith.andi %35, %37 : vector<1x256xi1>
    %c15_i32_9 = arith.constant 15 : i32
    %39 = vector.broadcast %c15_i32_9 : i32 to vector<1x256xi32>
    %40 = arith.cmpi sle, %25, %39 : vector<1x256xi32>
    %41 = arith.andi %38, %40 : vector<1x256xi1>
    %cst_10 = arith.constant 0.000000e+00 : f32
    %42 = vector.broadcast %cst_10 : f32 to vector<1x256xf32>
    %43 = arith.select %41, %30, %42 : vector<1x256xi1>, vector<1x256xf32>
    %44 = arith.mulf %20, %21 : vector<1x256xf32>
    %c0_i32_11 = arith.constant 0 : i32
    %45 = vector.broadcast %c0_i32_11 : i32 to vector<1x256xi32>
    %46 = arith.cmpi sge, %24, %45 : vector<1x256xi32>
    %c15_i32_12 = arith.constant 15 : i32
    %47 = vector.broadcast %c15_i32_12 : i32 to vector<1x256xi32>
    %48 = arith.cmpi sle, %24, %47 : vector<1x256xi32>
    %49 = arith.andi %46, %48 : vector<1x256xi1>
    %c0_i32_13 = arith.constant 0 : i32
    %50 = vector.broadcast %c0_i32_13 : i32 to vector<1x256xi32>
    %51 = arith.cmpi sge, %29, %50 : vector<1x256xi32>
    %52 = arith.andi %49, %51 : vector<1x256xi1>
    %c15_i32_14 = arith.constant 15 : i32
    %53 = vector.broadcast %c15_i32_14 : i32 to vector<1x256xi32>
    %54 = arith.cmpi sle, %29, %53 : vector<1x256xi32>
    %55 = arith.andi %52, %54 : vector<1x256xi1>
    %cst_15 = arith.constant 0.000000e+00 : f32
    %56 = vector.broadcast %cst_15 : f32 to vector<1x256xf32>
    %57 = arith.select %55, %44, %56 : vector<1x256xi1>, vector<1x256xf32>
    %58 = arith.mulf %18, %23 : vector<1x256xf32>
    %c0_i32_16 = arith.constant 0 : i32
    %59 = vector.broadcast %c0_i32_16 : i32 to vector<1x256xi32>
    %60 = arith.cmpi sge, %27, %59 : vector<1x256xi32>
    %c15_i32_17 = arith.constant 15 : i32
    %61 = vector.broadcast %c15_i32_17 : i32 to vector<1x256xi32>
    %62 = arith.cmpi sle, %27, %61 : vector<1x256xi32>
    %63 = arith.andi %60, %62 : vector<1x256xi1>
    %c0_i32_18 = arith.constant 0 : i32
    %64 = vector.broadcast %c0_i32_18 : i32 to vector<1x256xi32>
    %65 = arith.cmpi sge, %25, %64 : vector<1x256xi32>
    %66 = arith.andi %63, %65 : vector<1x256xi1>
    %c15_i32_19 = arith.constant 15 : i32
    %67 = vector.broadcast %c15_i32_19 : i32 to vector<1x256xi32>
    %68 = arith.cmpi sle, %25, %67 : vector<1x256xi32>
    %69 = arith.andi %66, %68 : vector<1x256xi1>
    %cst_20 = arith.constant 0.000000e+00 : f32
    %70 = vector.broadcast %cst_20 : f32 to vector<1x256xf32>
    %71 = arith.select %69, %58, %70 : vector<1x256xi1>, vector<1x256xf32>
    %72 = arith.mulf %18, %21 : vector<1x256xf32>
    %c0_i32_21 = arith.constant 0 : i32
    %73 = vector.broadcast %c0_i32_21 : i32 to vector<1x256xi32>
    %74 = arith.cmpi sge, %27, %73 : vector<1x256xi32>
    %c15_i32_22 = arith.constant 15 : i32
    %75 = vector.broadcast %c15_i32_22 : i32 to vector<1x256xi32>
    %76 = arith.cmpi sle, %27, %75 : vector<1x256xi32>
    %77 = arith.andi %74, %76 : vector<1x256xi1>
    %c0_i32_23 = arith.constant 0 : i32
    %78 = vector.broadcast %c0_i32_23 : i32 to vector<1x256xi32>
    %79 = arith.cmpi sge, %29, %78 : vector<1x256xi32>
    %80 = arith.andi %77, %79 : vector<1x256xi1>
    %c15_i32_24 = arith.constant 15 : i32
    %81 = vector.broadcast %c15_i32_24 : i32 to vector<1x256xi32>
    %82 = arith.cmpi sle, %29, %81 : vector<1x256xi32>
    %83 = arith.andi %80, %82 : vector<1x256xi1>
    %cst_25 = arith.constant 0.000000e+00 : f32
    %84 = vector.broadcast %cst_25 : f32 to vector<1x256xf32>
    %85 = arith.select %83, %72, %84 : vector<1x256xi1>, vector<1x256xf32>
    %c16_i32 = arith.constant 16 : i32
    %86 = vector.broadcast %c16_i32 : i32 to vector<1x256xi32>
    %87 = arith.muli %24, %86 : vector<1x256xi32>
    %88 = arith.addi %87, %25 : vector<1x256xi32>
    %c255_i32 = arith.constant 255 : i32
    %89 = vector.broadcast %c255_i32 : i32 to vector<1x256xi32>
    %90 = arith.andi %88, %89 : vector<1x256xi32>
    %c255_i32_26 = arith.constant 255 : i32
    %91 = tpu.dynamic_rotate %9 by %c255_i32_26 dim 1 : vector<4x256xf32>, i32 -> vector<4x256xf32>
    %c240_i32 = arith.constant 240 : i32
    %92 = tpu.dynamic_rotate %9 by %c240_i32 dim 1 : vector<4x256xf32>, i32 -> vector<4x256xf32>
    %c239_i32 = arith.constant 239 : i32
    %93 = tpu.dynamic_rotate %9 by %c239_i32 dim 1 : vector<4x256xf32>, i32 -> vector<4x256xf32>
    %94 = arith.truncf %9 : vector<4x256xf32> to vector<4x256xbf16>
    %95 = arith.extf %94 : vector<4x256xbf16> to vector<4x256xf32>
    %c0_27 = arith.constant 0 : index
    %c0_28 = arith.constant 0 : index
    %96 = vector.load %arg4[%c0_27, %c0_28] : memref<32x256xf32, #tpu.memory_space<vmem>>, vector<4x256xf32>
    tpu.vector_store %arg4[%c0_27, %c0_28], %95 {strides = array<i32>} : memref<32x256xf32, #tpu.memory_space<vmem>>, vector<4x256xf32>,
    %97 = arith.subf %9, %95 : vector<4x256xf32>
    %c16 = arith.constant 16 : index
    %c0_29 = arith.constant 0 : index
    %98 = vector.load %arg4[%c16, %c0_29] : memref<32x256xf32, #tpu.memory_space<vmem>>, vector<4x256xf32>
    tpu.vector_store %arg4[%c16, %c0_29], %97 {strides = array<i32>} : memref<32x256xf32, #tpu.memory_space<vmem>>, vector<4x256xf32>,
    %99 = arith.truncf %91 : vector<4x256xf32> to vector<4x256xbf16>
    %100 = arith.extf %99 : vector<4x256xbf16> to vector<4x256xf32>
    %c4 = arith.constant 4 : index
    %c0_30 = arith.constant 0 : index
    %101 = vector.load %arg4[%c4, %c0_30] : memref<32x256xf32, #tpu.memory_space<vmem>>, vector<4x256xf32>
    tpu.vector_store %arg4[%c4, %c0_30], %100 {strides = array<i32>} : memref<32x256xf32, #tpu.memory_space<vmem>>, vector<4x256xf32>,
    %102 = arith.subf %91, %100 : vector<4x256xf32>
    %c20 = arith.constant 20 : index
    %c0_31 = arith.constant 0 : index
    %103 = vector.load %arg4[%c20, %c0_31] : memref<32x256xf32, #tpu.memory_space<vmem>>, vector<4x256xf32>
    tpu.vector_store %arg4[%c20, %c0_31], %102 {strides = array<i32>} : memref<32x256xf32, #tpu.memory_space<vmem>>, vector<4x256xf32>,
    %104 = arith.truncf %92 : vector<4x256xf32> to vector<4x256xbf16>
    %105 = arith.extf %104 : vector<4x256xbf16> to vector<4x256xf32>
    %c8 = arith.constant 8 : index
    %c0_32 = arith.constant 0 : index
    %106 = vector.load %arg4[%c8, %c0_32] : memref<32x256xf32, #tpu.memory_space<vmem>>, vector<4x256xf32>
    tpu.vector_store %arg4[%c8, %c0_32], %105 {strides = array<i32>} : memref<32x256xf32, #tpu.memory_space<vmem>>, vector<4x256xf32>,
    %107 = arith.subf %92, %105 : vector<4x256xf32>
    %c24 = arith.constant 24 : index
    %c0_33 = arith.constant 0 : index
    %108 = vector.load %arg4[%c24, %c0_33] : memref<32x256xf32, #tpu.memory_space<vmem>>, vector<4x256xf32>
    tpu.vector_store %arg4[%c24, %c0_33], %107 {strides = array<i32>} : memref<32x256xf32, #tpu.memory_space<vmem>>, vector<4x256xf32>,
    %109 = arith.truncf %93 : vector<4x256xf32> to vector<4x256xbf16>
    %110 = arith.extf %109 : vector<4x256xbf16> to vector<4x256xf32>
    %c12 = arith.constant 12 : index
    %c0_34 = arith.constant 0 : index
    %111 = vector.load %arg4[%c12, %c0_34] : memref<32x256xf32, #tpu.memory_space<vmem>>, vector<4x256xf32>
    tpu.vector_store %arg4[%c12, %c0_34], %110 {strides = array<i32>} : memref<32x256xf32, #tpu.memory_space<vmem>>, vector<4x256xf32>,
    %112 = arith.subf %93, %110 : vector<4x256xf32>
    %c28 = arith.constant 28 : index
    %c0_35 = arith.constant 0 : index
    %113 = vector.load %arg4[%c28, %c0_35] : memref<32x256xf32, #tpu.memory_space<vmem>>, vector<4x256xf32>
    tpu.vector_store %arg4[%c28, %c0_35], %112 {strides = array<i32>} : memref<32x256xf32, #tpu.memory_space<vmem>>, vector<4x256xf32>,
    %c0_i32_36 = arith.constant 0 : i32
    %114 = vector.broadcast %c0_i32_36 : i32 to vector<1x256xi32>
    %115 = arith.subi %90, %114 : vector<1x256xi32>
    %116 = vector.broadcast %115 : vector<1x256xi32> to vector<256x256xi32>
    %117 = arith.cmpi eq, %0, %116 : vector<256x256xi32>
    %cst_37 = arith.constant 1.000000e+00 : f32
    %cst_38 = arith.constant 0.000000e+00 : f32
    %118 = vector.broadcast %cst_37 : f32 to vector<256x256xf32>
    %119 = vector.broadcast %cst_38 : f32 to vector<256x256xf32>
    %120 = arith.select %117, %118, %119 : vector<256x256xi1>, vector<256x256xf32>
    %c0_39 = arith.constant 0 : index
    %c0_40 = arith.constant 0 : index
    %121 = vector.load %arg4[%c0_39, %c0_40] : memref<32x256xf32, #tpu.memory_space<vmem>>, vector<32x256xf32>
    %cst_41 = arith.constant dense<0.000000e+00> : vector<32x256xf32>
    %122 = tpu.matmul %121, %120, %cst_41 {dimension_numbers = #tpu.dot_dimension_numbers<[1], [0], [0], [1], [0, 0, 1, 1], [], []>} : vector<32x256xf32>, vector<256x256xf32>, vector<32x256xf32> -> vector<32x256xf32>
    %123 = vector.extract_strided_slice %122 {offsets = [0, 0], sizes = [4, 256], strides = [1, 1]} : vector<32x256xf32> to vector<4x256xf32>
    %124 = vector.extract_strided_slice %122 {offsets = [16, 0], sizes = [4, 256], strides = [1, 1]} : vector<32x256xf32> to vector<4x256xf32>
    %125 = arith.addf %123, %124 : vector<4x256xf32>
    %126 = vector.broadcast %43 : vector<1x256xf32> to vector<4x256xf32>
    %127 = arith.mulf %125, %126 : vector<4x256xf32>
    %128 = vector.extract_strided_slice %122 {offsets = [4, 0], sizes = [4, 256], strides = [1, 1]} : vector<32x256xf32> to vector<4x256xf32>
    %129 = vector.extract_strided_slice %122 {offsets = [20, 0], sizes = [4, 256], strides = [1, 1]} : vector<32x256xf32> to vector<4x256xf32>
    %130 = arith.addf %128, %129 : vector<4x256xf32>
    %131 = vector.broadcast %57 : vector<1x256xf32> to vector<4x256xf32>
    %132 = arith.mulf %130, %131 : vector<4x256xf32>
    %133 = arith.addf %127, %132 : vector<4x256xf32>
    %134 = vector.extract_strided_slice %122 {offsets = [8, 0], sizes = [4, 256], strides = [1, 1]} : vector<32x256xf32> to vector<4x256xf32>
    %135 = vector.extract_strided_slice %122 {offsets = [24, 0], sizes = [4, 256], strides = [1, 1]} : vector<32x256xf32> to vector<4x256xf32>
    %136 = arith.addf %134, %135 : vector<4x256xf32>
    %137 = vector.broadcast %71 : vector<1x256xf32> to vector<4x256xf32>
    %138 = arith.mulf %136, %137 : vector<4x256xf32>
    %139 = arith.addf %133, %138 : vector<4x256xf32>
    %140 = vector.extract_strided_slice %122 {offsets = [12, 0], sizes = [4, 256], strides = [1, 1]} : vector<32x256xf32> to vector<4x256xf32>
    %141 = vector.extract_strided_slice %122 {offsets = [28, 0], sizes = [4, 256], strides = [1, 1]} : vector<32x256xf32> to vector<4x256xf32>
    %142 = arith.addf %140, %141 : vector<4x256xf32>
    %143 = vector.broadcast %85 : vector<1x256xf32> to vector<4x256xf32>
    %144 = arith.mulf %142, %143 : vector<4x256xf32>
    %145 = arith.addf %139, %144 : vector<4x256xf32>
    %c0_42 = arith.constant 0 : index
    %c0_43 = arith.constant 0 : index
    %c0_44 = arith.constant 0 : index
    %146 = vector.load %arg3[%c0_42, %c0_43, %c0_44] : memref<2x4x256xf32, #tpu.memory_space<vmem>>, vector<1x4x256xf32>
    %147 = vector.shape_cast %146 : vector<1x4x256xf32> to vector<4x256xf32>
    %148 = vector.shape_cast %145 : vector<4x256xf32> to vector<1x4x256xf32>
    tpu.vector_store %arg3[%c0_42, %c0_43, %c0_44], %148 {strides = array<i32>} : memref<2x4x256xf32, #tpu.memory_space<vmem>>, vector<1x4x256xf32>,
    %c1 = arith.constant 1 : index
    %c0_45 = arith.constant 0 : index
    %c0_46 = arith.constant 0 : index
    %149 = vector.load %arg2[%c1, %c0_45, %c0_46] : memref<2x4x256xf32, #tpu.memory_space<vmem>>, vector<1x4x256xf32>
    %150 = vector.shape_cast %149 : vector<1x4x256xf32> to vector<4x256xf32>
    %c1_47 = arith.constant 1 : index
    %c0_48 = arith.constant 0 : index
    %c0_49 = arith.constant 0 : index
    %151 = vector.load %arg1[%c1_47, %c0_48, %c0_49] : memref<2x2x256xf32, #tpu.memory_space<vmem>>, vector<1x2x256xf32>
    %152 = vector.shape_cast %151 : vector<1x2x256xf32> to vector<2x256xf32>
    %153 = vector.extract_strided_slice %152 {offsets = [0, 0], sizes = [1, 256], strides = [1, 1]} : vector<2x256xf32> to vector<1x256xf32>
    %154 = vector.extract_strided_slice %152 {offsets = [1, 0], sizes = [1, 256], strides = [1, 1]} : vector<2x256xf32> to vector<1x256xf32>
    %155 = arith.addf %4, %153 : vector<1x256xf32>
    %156 = arith.addf %7, %154 : vector<1x256xf32>
    %157 = math.floor %155 : vector<1x256xf32>
    %158 = math.floor %156 : vector<1x256xf32>
    %159 = arith.subf %155, %157 : vector<1x256xf32>
    %cst_50 = arith.constant 1.000000e+00 : f32
    %160 = vector.broadcast %cst_50 : f32 to vector<1x256xf32>
    %161 = arith.subf %160, %159 : vector<1x256xf32>
    %162 = arith.subf %156, %158 : vector<1x256xf32>
    %cst_51 = arith.constant 1.000000e+00 : f32
    %163 = vector.broadcast %cst_51 : f32 to vector<1x256xf32>
    %164 = arith.subf %163, %162 : vector<1x256xf32>
    %165 = arith.fptosi %157 : vector<1x256xf32> to vector<1x256xi32>
    %166 = arith.fptosi %158 : vector<1x256xf32> to vector<1x256xi32>
    %c1_i32_52 = arith.constant 1 : i32
    %167 = vector.broadcast %c1_i32_52 : i32 to vector<1x256xi32>
    %168 = arith.addi %165, %167 : vector<1x256xi32>
    %c1_i32_53 = arith.constant 1 : i32
    %169 = vector.broadcast %c1_i32_53 : i32 to vector<1x256xi32>
    %170 = arith.addi %166, %169 : vector<1x256xi32>
    %171 = arith.mulf %161, %164 : vector<1x256xf32>
    %c0_i32_54 = arith.constant 0 : i32
    %172 = vector.broadcast %c0_i32_54 : i32 to vector<1x256xi32>
    %173 = arith.cmpi sge, %165, %172 : vector<1x256xi32>
    %c15_i32_55 = arith.constant 15 : i32
    %174 = vector.broadcast %c15_i32_55 : i32 to vector<1x256xi32>
    %175 = arith.cmpi sle, %165, %174 : vector<1x256xi32>
    %176 = arith.andi %173, %175 : vector<1x256xi1>
    %c0_i32_56 = arith.constant 0 : i32
    %177 = vector.broadcast %c0_i32_56 : i32 to vector<1x256xi32>
    %178 = arith.cmpi sge, %166, %177 : vector<1x256xi32>
    %179 = arith.andi %176, %178 : vector<1x256xi1>
    %c15_i32_57 = arith.constant 15 : i32
    %180 = vector.broadcast %c15_i32_57 : i32 to vector<1x256xi32>
    %181 = arith.cmpi sle, %166, %180 : vector<1x256xi32>
    %182 = arith.andi %179, %181 : vector<1x256xi1>
    %cst_58 = arith.constant 0.000000e+00 : f32
    %183 = vector.broadcast %cst_58 : f32 to vector<1x256xf32>
    %184 = arith.select %182, %171, %183 : vector<1x256xi1>, vector<1x256xf32>
    %185 = arith.mulf %161, %162 : vector<1x256xf32>
    %c0_i32_59 = arith.constant 0 : i32
    %186 = vector.broadcast %c0_i32_59 : i32 to vector<1x256xi32>
    %187 = arith.cmpi sge, %165, %186 : vector<1x256xi32>
    %c15_i32_60 = arith.constant 15 : i32
    %188 = vector.broadcast %c15_i32_60 : i32 to vector<1x256xi32>
    %189 = arith.cmpi sle, %165, %188 : vector<1x256xi32>
    %190 = arith.andi %187, %189 : vector<1x256xi1>
    %c0_i32_61 = arith.constant 0 : i32
    %191 = vector.broadcast %c0_i32_61 : i32 to vector<1x256xi32>
    %192 = arith.cmpi sge, %170, %191 : vector<1x256xi32>
    %193 = arith.andi %190, %192 : vector<1x256xi1>
    %c15_i32_62 = arith.constant 15 : i32
    %194 = vector.broadcast %c15_i32_62 : i32 to vector<1x256xi32>
    %195 = arith.cmpi sle, %170, %194 : vector<1x256xi32>
    %196 = arith.andi %193, %195 : vector<1x256xi1>
    %cst_63 = arith.constant 0.000000e+00 : f32
    %197 = vector.broadcast %cst_63 : f32 to vector<1x256xf32>
    %198 = arith.select %196, %185, %197 : vector<1x256xi1>, vector<1x256xf32>
    %199 = arith.mulf %159, %164 : vector<1x256xf32>
    %c0_i32_64 = arith.constant 0 : i32
    %200 = vector.broadcast %c0_i32_64 : i32 to vector<1x256xi32>
    %201 = arith.cmpi sge, %168, %200 : vector<1x256xi32>
    %c15_i32_65 = arith.constant 15 : i32
    %202 = vector.broadcast %c15_i32_65 : i32 to vector<1x256xi32>
    %203 = arith.cmpi sle, %168, %202 : vector<1x256xi32>
    %204 = arith.andi %201, %203 : vector<1x256xi1>
    %c0_i32_66 = arith.constant 0 : i32
    %205 = vector.broadcast %c0_i32_66 : i32 to vector<1x256xi32>
    %206 = arith.cmpi sge, %166, %205 : vector<1x256xi32>
    %207 = arith.andi %204, %206 : vector<1x256xi1>
    %c15_i32_67 = arith.constant 15 : i32
    %208 = vector.broadcast %c15_i32_67 : i32 to vector<1x256xi32>
    %209 = arith.cmpi sle, %166, %208 : vector<1x256xi32>
    %210 = arith.andi %207, %209 : vector<1x256xi1>
    %cst_68 = arith.constant 0.000000e+00 : f32
    %211 = vector.broadcast %cst_68 : f32 to vector<1x256xf32>
    %212 = arith.select %210, %199, %211 : vector<1x256xi1>, vector<1x256xf32>
    %213 = arith.mulf %159, %162 : vector<1x256xf32>
    %c0_i32_69 = arith.constant 0 : i32
    %214 = vector.broadcast %c0_i32_69 : i32 to vector<1x256xi32>
    %215 = arith.cmpi sge, %168, %214 : vector<1x256xi32>
    %c15_i32_70 = arith.constant 15 : i32
    %216 = vector.broadcast %c15_i32_70 : i32 to vector<1x256xi32>
    %217 = arith.cmpi sle, %168, %216 : vector<1x256xi32>
    %218 = arith.andi %215, %217 : vector<1x256xi1>
    %c0_i32_71 = arith.constant 0 : i32
    %219 = vector.broadcast %c0_i32_71 : i32 to vector<1x256xi32>
    %220 = arith.cmpi sge, %170, %219 : vector<1x256xi32>
    %221 = arith.andi %218, %220 : vector<1x256xi1>
    %c15_i32_72 = arith.constant 15 : i32
    %222 = vector.broadcast %c15_i32_72 : i32 to vector<1x256xi32>
    %223 = arith.cmpi sle, %170, %222 : vector<1x256xi32>
    %224 = arith.andi %221, %223 : vector<1x256xi1>
    %cst_73 = arith.constant 0.000000e+00 : f32
    %225 = vector.broadcast %cst_73 : f32 to vector<1x256xf32>
    %226 = arith.select %224, %213, %225 : vector<1x256xi1>, vector<1x256xf32>
    %c16_i32_74 = arith.constant 16 : i32
    %227 = vector.broadcast %c16_i32_74 : i32 to vector<1x256xi32>
    %228 = arith.muli %165, %227 : vector<1x256xi32>
    %229 = arith.addi %228, %166 : vector<1x256xi32>
    %c255_i32_75 = arith.constant 255 : i32
    %230 = vector.broadcast %c255_i32_75 : i32 to vector<1x256xi32>
    %231 = arith.andi %229, %230 : vector<1x256xi32>
    %c255_i32_76 = arith.constant 255 : i32
    %232 = tpu.dynamic_rotate %150 by %c255_i32_76 dim 1 : vector<4x256xf32>, i32 -> vector<4x256xf32>
    %c240_i32_77 = arith.constant 240 : i32
    %233 = tpu.dynamic_rotate %150 by %c240_i32_77 dim 1 : vector<4x256xf32>, i32 -> vector<4x256xf32>
    %c239_i32_78 = arith.constant 239 : i32
    %234 = tpu.dynamic_rotate %150 by %c239_i32_78 dim 1 : vector<4x256xf32>, i32 -> vector<4x256xf32>
    %235 = arith.truncf %150 : vector<4x256xf32> to vector<4x256xbf16>
    %236 = arith.extf %235 : vector<4x256xbf16> to vector<4x256xf32>
    %c0_79 = arith.constant 0 : index
    %c0_80 = arith.constant 0 : index
    %237 = vector.load %arg4[%c0_79, %c0_80] : memref<32x256xf32, #tpu.memory_space<vmem>>, vector<4x256xf32>
    tpu.vector_store %arg4[%c0_79, %c0_80], %236 {strides = array<i32>} : memref<32x256xf32, #tpu.memory_space<vmem>>, vector<4x256xf32>,
    %238 = arith.subf %150, %236 : vector<4x256xf32>
    %c16_81 = arith.constant 16 : index
    %c0_82 = arith.constant 0 : index
    %239 = vector.load %arg4[%c16_81, %c0_82] : memref<32x256xf32, #tpu.memory_space<vmem>>, vector<4x256xf32>
    tpu.vector_store %arg4[%c16_81, %c0_82], %238 {strides = array<i32>} : memref<32x256xf32, #tpu.memory_space<vmem>>, vector<4x256xf32>,
    %240 = arith.truncf %232 : vector<4x256xf32> to vector<4x256xbf16>
    %241 = arith.extf %240 : vector<4x256xbf16> to vector<4x256xf32>
    %c4_83 = arith.constant 4 : index
    %c0_84 = arith.constant 0 : index
    %242 = vector.load %arg4[%c4_83, %c0_84] : memref<32x256xf32, #tpu.memory_space<vmem>>, vector<4x256xf32>
    tpu.vector_store %arg4[%c4_83, %c0_84], %241 {strides = array<i32>} : memref<32x256xf32, #tpu.memory_space<vmem>>, vector<4x256xf32>,
    %243 = arith.subf %232, %241 : vector<4x256xf32>
    %c20_85 = arith.constant 20 : index
    %c0_86 = arith.constant 0 : index
    %244 = vector.load %arg4[%c20_85, %c0_86] : memref<32x256xf32, #tpu.memory_space<vmem>>, vector<4x256xf32>
    tpu.vector_store %arg4[%c20_85, %c0_86], %243 {strides = array<i32>} : memref<32x256xf32, #tpu.memory_space<vmem>>, vector<4x256xf32>,
    %245 = arith.truncf %233 : vector<4x256xf32> to vector<4x256xbf16>
    %246 = arith.extf %245 : vector<4x256xbf16> to vector<4x256xf32>
    %c8_87 = arith.constant 8 : index
    %c0_88 = arith.constant 0 : index
    %247 = vector.load %arg4[%c8_87, %c0_88] : memref<32x256xf32, #tpu.memory_space<vmem>>, vector<4x256xf32>
    tpu.vector_store %arg4[%c8_87, %c0_88], %246 {strides = array<i32>} : memref<32x256xf32, #tpu.memory_space<vmem>>, vector<4x256xf32>,
    %248 = arith.subf %233, %246 : vector<4x256xf32>
    %c24_89 = arith.constant 24 : index
    %c0_90 = arith.constant 0 : index
    %249 = vector.load %arg4[%c24_89, %c0_90] : memref<32x256xf32, #tpu.memory_space<vmem>>, vector<4x256xf32>
    tpu.vector_store %arg4[%c24_89, %c0_90], %248 {strides = array<i32>} : memref<32x256xf32, #tpu.memory_space<vmem>>, vector<4x256xf32>,
    %250 = arith.truncf %234 : vector<4x256xf32> to vector<4x256xbf16>
    %251 = arith.extf %250 : vector<4x256xbf16> to vector<4x256xf32>
    %c12_91 = arith.constant 12 : index
    %c0_92 = arith.constant 0 : index
    %252 = vector.load %arg4[%c12_91, %c0_92] : memref<32x256xf32, #tpu.memory_space<vmem>>, vector<4x256xf32>
    tpu.vector_store %arg4[%c12_91, %c0_92], %251 {strides = array<i32>} : memref<32x256xf32, #tpu.memory_space<vmem>>, vector<4x256xf32>,
    %253 = arith.subf %234, %251 : vector<4x256xf32>
    %c28_93 = arith.constant 28 : index
    %c0_94 = arith.constant 0 : index
    %254 = vector.load %arg4[%c28_93, %c0_94] : memref<32x256xf32, #tpu.memory_space<vmem>>, vector<4x256xf32>
    tpu.vector_store %arg4[%c28_93, %c0_94], %253 {strides = array<i32>} : memref<32x256xf32, #tpu.memory_space<vmem>>, vector<4x256xf32>,
    %c0_i32_95 = arith.constant 0 : i32
    %255 = vector.broadcast %c0_i32_95 : i32 to vector<1x256xi32>
    %256 = arith.subi %231, %255 : vector<1x256xi32>
    %257 = vector.broadcast %256 : vector<1x256xi32> to vector<256x256xi32>
    %258 = arith.cmpi eq, %0, %257 : vector<256x256xi32>
    %cst_96 = arith.constant 1.000000e+00 : f32
    %cst_97 = arith.constant 0.000000e+00 : f32
    %259 = vector.broadcast %cst_96 : f32 to vector<256x256xf32>
    %260 = vector.broadcast %cst_97 : f32 to vector<256x256xf32>
    %261 = arith.select %258, %259, %260 : vector<256x256xi1>, vector<256x256xf32>
    %c0_98 = arith.constant 0 : index
    %c0_99 = arith.constant 0 : index
    %262 = vector.load %arg4[%c0_98, %c0_99] : memref<32x256xf32, #tpu.memory_space<vmem>>, vector<32x256xf32>
    %cst_100 = arith.constant dense<0.000000e+00> : vector<32x256xf32>
    %263 = tpu.matmul %262, %261, %cst_100 {dimension_numbers = #tpu.dot_dimension_numbers<[1], [0], [0], [1], [0, 0, 1, 1], [], []>} : vector<32x256xf32>, vector<256x256xf32>, vector<32x256xf32> -> vector<32x256xf32>
    %264 = vector.extract_strided_slice %263 {offsets = [0, 0], sizes = [4, 256], strides = [1, 1]} : vector<32x256xf32> to vector<4x256xf32>
    %265 = vector.extract_strided_slice %263 {offsets = [16, 0], sizes = [4, 256], strides = [1, 1]} : vector<32x256xf32> to vector<4x256xf32>
    %266 = arith.addf %264, %265 : vector<4x256xf32>
    %267 = vector.broadcast %184 : vector<1x256xf32> to vector<4x256xf32>
    %268 = arith.mulf %266, %267 : vector<4x256xf32>
    %269 = vector.extract_strided_slice %263 {offsets = [4, 0], sizes = [4, 256], strides = [1, 1]} : vector<32x256xf32> to vector<4x256xf32>
    %270 = vector.extract_strided_slice %263 {offsets = [20, 0], sizes = [4, 256], strides = [1, 1]} : vector<32x256xf32> to vector<4x256xf32>
    %271 = arith.addf %269, %270 : vector<4x256xf32>
    %272 = vector.broadcast %198 : vector<1x256xf32> to vector<4x256xf32>
    %273 = arith.mulf %271, %272 : vector<4x256xf32>
    %274 = arith.addf %268, %273 : vector<4x256xf32>
    %275 = vector.extract_strided_slice %263 {offsets = [8, 0], sizes = [4, 256], strides = [1, 1]} : vector<32x256xf32> to vector<4x256xf32>
    %276 = vector.extract_strided_slice %263 {offsets = [24, 0], sizes = [4, 256], strides = [1, 1]} : vector<32x256xf32> to vector<4x256xf32>
    %277 = arith.addf %275, %276 : vector<4x256xf32>
    %278 = vector.broadcast %212 : vector<1x256xf32> to vector<4x256xf32>
    %279 = arith.mulf %277, %278 : vector<4x256xf32>
    %280 = arith.addf %274, %279 : vector<4x256xf32>
    %281 = vector.extract_strided_slice %263 {offsets = [12, 0], sizes = [4, 256], strides = [1, 1]} : vector<32x256xf32> to vector<4x256xf32>
    %282 = vector.extract_strided_slice %263 {offsets = [28, 0], sizes = [4, 256], strides = [1, 1]} : vector<32x256xf32> to vector<4x256xf32>
    %283 = arith.addf %281, %282 : vector<4x256xf32>
    %284 = vector.broadcast %226 : vector<1x256xf32> to vector<4x256xf32>
    %285 = arith.mulf %283, %284 : vector<4x256xf32>
    %286 = arith.addf %280, %285 : vector<4x256xf32>
    %c1_101 = arith.constant 1 : index
    %c0_102 = arith.constant 0 : index
    %c0_103 = arith.constant 0 : index
    %287 = vector.load %arg3[%c1_101, %c0_102, %c0_103] : memref<2x4x256xf32, #tpu.memory_space<vmem>>, vector<1x4x256xf32>
    %288 = vector.shape_cast %287 : vector<1x4x256xf32> to vector<4x256xf32>
    %289 = vector.shape_cast %286 : vector<4x256xf32> to vector<1x4x256xf32>
    tpu.vector_store %arg3[%c1_101, %c0_102, %c0_103], %289 {strides = array<i32>} : memref<2x4x256xf32, #tpu.memory_space<vmem>>, vector<1x4x256xf32>,
    return
  }
  func.func @transform_0(%arg0: i32) -> (i32, i32, i32) {
    %c0_i32 = arith.constant 0 : i32
    %c0_i32_0 = arith.constant 0 : i32
    %c0_i32_1 = arith.constant 0 : i32
    return %arg0, %c0_i32, %c0_i32_0 : i32, i32, i32
  }
  func.func @transform_1(%arg0: i32) -> (i32, i32, i32) {
    %c0_i32 = arith.constant 0 : i32
    %c0_i32_0 = arith.constant 0 : i32
    %c0_i32_1 = arith.constant 0 : i32
    return %arg0, %c0_i32, %c0_i32_0 : i32, i32, i32
  }
  func.func @transform_2(%arg0: i32) -> (i32, i32, i32) {
    %c0_i32 = arith.constant 0 : i32
    %c0_i32_0 = arith.constant 0 : i32
    %c0_i32_1 = arith.constant 0 : i32
    return %arg0, %c0_i32, %c0_i32_0 : i32, i32, i32
  }
}

</mosaic_0001>

<llo_original>
// kernel: tpu_custom_call.1
$region0: #{tpu_custom_call.1}
  #allocation0 [shape = 'u32[]', space=smem, size = 0x4, offset = 0x4, fixed_abs, tag = 'smem constant byte address 0x4 - core index']
  #allocation1 [shape = 'u32[144,128]{1,0:T(1,128)}', space=vmem, size = 0x12000, scoped, tag = 'internal scratch']
  #allocation2 [shape = 'f32[32,256]{1,0:T(8,128)}', space=vmem, size = 0x8000, scoped, tag = 'scratch operand']
  %s0 = inlined_call_operand.hbm [shape: f32[2,2,256], index: 0, kind: input, shape index: {}]
  %s1 = inlined_call_operand.hbm [shape: f32[2,4,256], index: 1, kind: input, shape index: {}]
  %s2 = inlined_call_operand.hbm [shape: f32[2,4,256], index: 2, kind: output, shape index: {}]
  %s3 = sld [smem:[#allocation0]]
  $region26: #{tpu_custom_call.1} parent=0
    _
  %s5 = ssub.s32 1, %s3
  %s6 = scalar_select 0, %s5, %s3
  $region1: #{tpu_custom_call.1} parent=0
    #allocation3 [shape = 'u8[4096]{0}', space=vmem, size = 0x1000, scoped, tag = 'input window, operand 0, single buffered']
    #allocation4 [shape = 's32[1]{0}', space=sflag, size = 0x4, scoped, tag = 'scoped memory for tpu_custom_call.1']
    #allocation5 [shape = 's32[1]{0}', space=sflag, size = 0x4, scoped, tag = 'scoped memory for tpu_custom_call.1']
    #allocation6 [shape = 'u8[8192]{0}', space=vmem, size = 0x2000, scoped, tag = 'input window, operand 1, single buffered']
    #allocation7 [shape = 's32[1]{0}', space=sflag, size = 0x4, scoped, tag = 'scoped memory for tpu_custom_call.1']
    #allocation8 [shape = 'u8[8192]{0}', space=vmem, size = 0x2000, scoped, tag = 'output window, operand 0, single buffered']
    %7 = vsyncpa [#allocation4], 0
    %8 = vsyncpa [#allocation7], 0
    %9 = vsyncpa [#allocation5], 0
    // Predicated region
    $region2: #{tpu_custom_call.1} parent=1 // pred_check
      _
    $region3: #{tpu_custom_call.1} parent=1 // pred_check_branch
      %11 = sbr.rel (0) target = $region5
    $region4: #{tpu_custom_call.1} parent=1 // pred_region
      %s13 = ssub.s32 128, 128
      %14 = vsyncadd [#allocation4], %s13
      %s15 = sshll.u32 [#allocation3], 4
      %s16 = int_to_ptr.vmem [resolvable:$true] %s15
      %21 = dma.hbm_to_vmem [thread:$0]  %s0, 128, %s16, [#allocation4], 64, 64, 4
    $region5: #{tpu_custom_call.1} parent=1 // pred_fallthru
      _
    // Predicated region
    $region6: #{tpu_custom_call.1} parent=1 // pred_check
      _
    $region7: #{tpu_custom_call.1} parent=1 // pred_check_branch
      %23 = sbr.rel (0) target = $region9
    $region8: #{tpu_custom_call.1} parent=1 // pred_region
      %s25 = ssub.s32 256, 256
      %26 = vsyncadd [#allocation7], %s25
      %s27 = sshll.u32 [#allocation6], 4
      %s28 = int_to_ptr.vmem [resolvable:$true] %s27
      %33 = dma.hbm_to_vmem [thread:$0]  %s1, 256, %s28, [#allocation7], 128, 128, 8
    $region9: #{tpu_custom_call.1} parent=1 // pred_fallthru
      _
    // Predicated region
    $region10: #{tpu_custom_call.1} parent=1 // pred_check
      _
    $region11: #{tpu_custom_call.1} parent=1 // pred_check_branch
      %35 = sbr.rel (0) target = $region13
    $region12: #{tpu_custom_call.1} parent=1 // pred_region
      %36 = dma.done [#allocation4], 128
    $region13: #{tpu_custom_call.1} parent=1 // pred_fallthru
      _
    // Predicated region
    $region14: #{tpu_custom_call.1} parent=1 // pred_check
      _
    $region15: #{tpu_custom_call.1} parent=1 // pred_check_branch
      %38 = sbr.rel (0) target = $region17
    $region16: #{tpu_custom_call.1} parent=1 // pred_region
      %39 = dma.done [#allocation7], 256
    $region17: #{tpu_custom_call.1} parent=1 // pred_fallthru
      _
    %v40 = vlaneseq
    %v41 = vshrl.u32 %v40, 7
    %v42 = vadd.s32 %v41, 8
    %v43 = vadd.s32 %v41, 16
    %v44 = vadd.s32 %v41, 24
    %v45 = vadd.s32 %v41, 32
    %v46 = vadd.s32 %v41, 40
    %v47 = vadd.s32 %v41, 48
    %v48 = vadd.s32 %v41, 56
    %v49 = vadd.s32 %v41, 64
    %v50 = vadd.s32 %v41, 72
    %v51 = vadd.s32 %v41, 80
    %v52 = vadd.s32 %v41, 88
    %v53 = vadd.s32 %v41, 96
    %v54 = vadd.s32 %v41, 104
    %v55 = vadd.s32 %v41, 112
    %v56 = vadd.s32 %v41, 120
    %v57 = vadd.s32 %v41, 128
    %v58 = vadd.s32 %v41, 136
    %v59 = vadd.s32 %v41, 144
    %v60 = vadd.s32 %v41, 152
    %v61 = vadd.s32 %v41, 160
    %v62 = vadd.s32 %v41, 168
    %v63 = vadd.s32 %v41, 176
    %v64 = vadd.s32 %v41, 184
    %v65 = vadd.s32 %v41, 192
    %v66 = vadd.s32 %v41, 200
    %v67 = vadd.s32 %v41, 208
    %v68 = vadd.s32 %v41, 216
    %v69 = vadd.s32 %v41, 224
    %v70 = vadd.s32 %v41, 232
    %v71 = vadd.s32 %v41, 240
    %v72 = vadd.s32 %v41, 248
    %v73 = vlaneseq
    %v74 = vand.u32 %v73, 127
    %v75 = vadd.s32 %v74, 128
    %v76 = vshra.s32 %v74, 4
    %v77 = vshra.s32 %v75, 4
    %v78 = vcvt.s32.f32 %v76
    %v79 = vcvt.s32.f32 %v77
    %v80 = vand.u32 %v74, 15
    %v81 = vand.u32 %v75, 15
    %v82 = vcvt.s32.f32 %v80
    %v83 = vcvt.s32.f32 %v81
    %v84 = vld [vmem:[#allocation6] sm:$0xff]
    %v85 = vld [vmem:[#allocation3] sm:$0xf]
    %v87 = vlaneseq
    %v88 = vshrl.u32 %v87, 7
    %v89 = vsub.s32 0, %v88
    %v90 = vrot.slane %v85, %v89
    %v91 = vlaneseq
    %v92 = vshrl.u32 %v91, 7
    %v93 = vsub.s32 2, %v92
    %v94 = vrot.slane %v85, %v93
    %v97 = vadd.f32 %v78, %v90
    %v98 = vadd.f32 %v79, %v94
    %v99 = vlaneseq
    %v100 = vshrl.u32 %v99, 7
    %v101 = vsub.s32 1, %v100
    %v102 = vrot.slane %v85, %v101
    %v103 = vlaneseq
    %v104 = vshrl.u32 %v103, 7
    %v105 = vsub.s32 3, %v104
    %v106 = vrot.slane %v85, %v105
    %v109 = vadd.f32 %v82, %v102
    %v110 = vadd.f32 %v83, %v106
    %v111 = vfloor.f32 %v97
    %v112 = vfloor.f32 %v98
    %v113 = vfloor.f32 %v109
    %v114 = vfloor.f32 %v110
    %v115 = vsub.f32 %v97, %v111
    %v116 = vsub.f32 %v98, %v112
    %v117 = vsub.f32 1.0, %v115
    %v118 = vsub.f32 1.0, %v116
    %v119 = vsub.f32 %v109, %v113
    %v120 = vsub.f32 %v110, %v114
    %v121 = vsub.f32 1.0, %v119
    %v122 = vsub.f32 1.0, %v120
    %v123 = vcvt.f32.s32.to.zero.pseudo %v111
    %v124 = vcvt.f32.s32.to.zero.pseudo %v112
    %v125 = vcvt.f32.s32.to.zero.pseudo %v113
    %v126 = vcvt.f32.s32.to.zero.pseudo %v114
    %v127 = vadd.s32 %v123, 1
    %v128 = vadd.s32 %v124, 1
    %v129 = vadd.s32 %v125, 1
    %v130 = vadd.s32 %v126, 1
    %v131 = vmul.f32 %v117, %v121
    %v132 = vmul.f32 %v118, %v122
    %vm133 = vcmp.ge.s32.totalorder %v123, 0
    %vm134 = vcmp.ge.s32.totalorder %v124, 0
    %vm135 = vcmp.le.s32.totalorder %v123, 15
    %vm136 = vcmp.le.s32.totalorder %v124, 15
    %vm137 = vmand %vm133, %vm135
    %vm138 = vmand %vm134, %vm136
    %vm139 = vcmp.ge.s32.totalorder %v125, 0
    %vm140 = vcmp.ge.s32.totalorder %v126, 0
    %vm141 = vmand %vm137, %vm139
    %vm142 = vmand %vm138, %vm140
    %vm143 = vcmp.le.s32.totalorder %v125, 15
    %vm144 = vcmp.le.s32.totalorder %v126, 15
    %vm145 = vmand %vm141, %vm143
    %vm146 = vmand %vm142, %vm144
    %v147 = vsel %vm145, %v131, 0.0
    %v148 = vsel %vm146, %v132, 0.0
    %v149 = vmul.f32 %v117, %v119
    %v150 = vmul.f32 %v118, %v120
    %vm151 = vcmp.ge.s32.totalorder %v129, 0
    %vm152 = vcmp.ge.s32.totalorder %v130, 0
    %vm153 = vmand %vm137, %vm151
    %vm154 = vmand %vm138, %vm152
    %vm155 = vcmp.le.s32.totalorder %v129, 15
    %vm156 = vcmp.le.s32.totalorder %v130, 15
    %vm157 = vmand %vm153, %vm155
    %vm158 = vmand %vm154, %vm156
    %v159 = vsel %vm157, %v149, 0.0
    %v160 = vsel %vm158, %v150, 0.0
    %v161 = vmul.f32 %v115, %v121
    %v162 = vmul.f32 %v116, %v122
    %vm163 = vcmp.ge.s32.totalorder %v127, 0
    %vm164 = vcmp.ge.s32.totalorder %v128, 0
    %vm165 = vcmp.le.s32.totalorder %v127, 15
    %vm166 = vcmp.le.s32.totalorder %v128, 15
    %vm167 = vmand %vm163, %vm165
    %vm168 = vmand %vm164, %vm166
    %vm169 = vmand %vm167, %vm139
    %vm170 = vmand %vm168, %vm140
    %vm171 = vmand %vm169, %vm143
    %vm172 = vmand %vm170, %vm144
    %v173 = vsel %vm171, %v161, 0.0
    %v174 = vsel %vm172, %v162, 0.0
    %v175 = vmul.f32 %v115, %v119
    %v176 = vmul.f32 %v116, %v120
    %vm177 = vmand %vm167, %vm151
    %vm178 = vmand %vm168, %vm152
    %vm179 = vmand %vm177, %vm155
    %vm180 = vmand %vm178, %vm156
    %v181 = vsel %vm179, %v175, 0.0
    %v182 = vsel %vm180, %v176, 0.0
    %v183 = vmul.u32 %v123, 16
    %v184 = vmul.u32 %v124, 16
    %v185 = vadd.s32 %v183, %v125
    %v186 = vadd.s32 %v184, %v126
    %v187 = vand.u32 %v185, 255
    %v188 = vand.u32 %v186, 255
    %v190 = vcombine.high %v84, %v84
    %192 = vrot.lane.b32.xlu0 %v84, 127
    %v193 = vpop.permute.xlu0 %192
    %194 = vrot.lane.b32.xlu0 %v190, 127
    %v195 = vpop.permute.xlu0 %194
    %vm196 = vcmp.lt.s32.totalorder %v74, 127
    %v197 = vsel %vm196, %v193, %v195
    %v198 = vsel %vm196, %v195, %v193
    %199 = vrot.lane.b32.xlu0 %v84, 112
    %v200 = vpop.permute.xlu0 %199
    %201 = vrot.lane.b32.xlu0 %v190, 112
    %v202 = vpop.permute.xlu0 %201
    %vm203 = vcmp.lt.s32.totalorder %v74, 112
    %v204 = vsel %vm203, %v200, %v202
    %v205 = vsel %vm203, %v202, %v200
    %206 = vrot.lane.b32.xlu0 %v84, 111
    %v207 = vpop.permute.xlu0 %206
    %208 = vrot.lane.b32.xlu0 %v190, 111
    %v209 = vpop.permute.xlu0 %208
    %vm210 = vcmp.lt.s32.totalorder %v74, 111
    %v211 = vsel %vm210, %v207, %v209
    %v212 = vsel %vm210, %v209, %v207
    %v213 = vpack.c.bf16 %v84, %v84
    %v214 = vpack.c.bf16 %v190, %v190
    %v215 = vunpack.c.l.bf16 %v213
    %v216 = vunpack.c.l.bf16 %v214
    %217 = vst [vmem:[#allocation2] sm:$0xf] %v215
    %218 = vst [vmem:[#allocation2 + $0x8] sm:$0xf] %v216
    %v221 = vcombine.low %v215, %v216
    %v223 = vsub.f32 %v84, %v221
    %v225 = vcombine.high %v223, %v223
    %227 = vst [vmem:[#allocation2 + $0x20] sm:$0xf] %v223
    %228 = vst [vmem:[#allocation2 + $0x28] sm:$0xf] %v225
    %v229 = vpack.c.bf16 %v197, %v197
    %v230 = vpack.c.bf16 %v198, %v198
    %v231 = vunpack.c.l.bf16 %v229
    %v232 = vunpack.c.l.bf16 %v230
    %v235 = vrot.slane %v231, 4
    %v236 = vrot.slane %v232, 4
    %239 = vst [vmem:[#allocation2] sm:$0xf0] %v235
    %240 = vst [vmem:[#allocation2 + $0x8] sm:$0xf0] %v236
    %v241 = vsub.f32 %v197, %v231
    %v242 = vsub.f32 %v198, %v232
    %v245 = vrot.slane %v241, 4
    %v246 = vrot.slane %v242, 4
    %249 = vst [vmem:[#allocation2 + $0x20] sm:$0xf0] %v245
    %250 = vst [vmem:[#allocation2 + $0x28] sm:$0xf0] %v246
    %v251 = vpack.c.bf16 %v204, %v204
    %v252 = vpack.c.bf16 %v205, %v205
    %v253 = vunpack.c.l.bf16 %v251
    %v254 = vunpack.c.l.bf16 %v252
    %255 = vst [vmem:[#allocation2 + $0x10] sm:$0xf] %v253
    %256 = vst [vmem:[#allocation2 + $0x18] sm:$0xf] %v254
    %v257 = vsub.f32 %v204, %v253
    %v258 = vsub.f32 %v205, %v254
    %259 = vst [vmem:[#allocation2 + $0x30] sm:$0xf] %v257
    %260 = vst [vmem:[#allocation2 + $0x38] sm:$0xf] %v258
    %v261 = vpack.c.bf16 %v211, %v211
    %v262 = vpack.c.bf16 %v212, %v212
    %v263 = vunpack.c.l.bf16 %v261
    %v264 = vunpack.c.l.bf16 %v262
    %v267 = vrot.slane %v263, 4
    %v268 = vrot.slane %v264, 4
    %271 = vst [vmem:[#allocation2 + $0x10] sm:$0xf0] %v267
    %272 = vst [vmem:[#allocation2 + $0x18] sm:$0xf0] %v268
    %v273 = vsub.f32 %v211, %v263
    %v274 = vsub.f32 %v212, %v264
    %v277 = vrot.slane %v273, 4
    %v278 = vrot.slane %v274, 4
    %281 = vst [vmem:[#allocation2 + $0x30] sm:$0xf0] %v277
    %282 = vst [vmem:[#allocation2 + $0x38] sm:$0xf0] %v278
    %v283 = vlaneseq
    %v284 = vshrl.u32 %v283, 7
    %v285 = vsub.s32 0, %v284
    %v286 = vrot.slane %v187, %v285
    %v287 = vlaneseq
    %v288 = vshrl.u32 %v287, 7
    %v289 = vsub.s32 0, %v288
    %v290 = vrot.slane %v188, %v289
    %vm291 = vcmp.eq.s32.totalorder %v41, %v286
    %vm292 = vcmp.eq.s32.totalorder %v41, %v290
    %vm293 = vcmp.eq.s32.totalorder %v42, %v286
    %vm294 = vcmp.eq.s32.totalorder %v42, %v290
    %vm295 = vcmp.eq.s32.totalorder %v43, %v286
    %vm296 = vcmp.eq.s32.totalorder %v43, %v290
    %vm297 = vcmp.eq.s32.totalorder %v44, %v286
    %vm298 = vcmp.eq.s32.totalorder %v44, %v290
    %vm299 = vcmp.eq.s32.totalorder %v45, %v286
    %vm300 = vcmp.eq.s32.totalorder %v45, %v290
    %vm301 = vcmp.eq.s32.totalorder %v46, %v286
    %vm302 = vcmp.eq.s32.totalorder %v46, %v290
    %vm303 = vcmp.eq.s32.totalorder %v47, %v286
    %vm304 = vcmp.eq.s32.totalorder %v47, %v290
    %vm305 = vcmp.eq.s32.totalorder %v48, %v286
    %vm306 = vcmp.eq.s32.totalorder %v48, %v290
    %vm307 = vcmp.eq.s32.totalorder %v49, %v286
    %vm308 = vcmp.eq.s32.totalorder %v49, %v290
    %vm309 = vcmp.eq.s32.totalorder %v50, %v286
    %vm310 = vcmp.eq.s32.totalorder %v50, %v290
    %vm311 = vcmp.eq.s32.totalorder %v51, %v286
    %vm312 = vcmp.eq.s32.totalorder %v51, %v290
    %vm313 = vcmp.eq.s32.totalorder %v52, %v286
    %vm314 = vcmp.eq.s32.totalorder %v52, %v290
    %vm315 = vcmp.eq.s32.totalorder %v53, %v286
    %vm316 = vcmp.eq.s32.totalorder %v53, %v290
    %vm317 = vcmp.eq.s32.totalorder %v54, %v286
    %vm318 = vcmp.eq.s32.totalorder %v54, %v290
    %vm319 = vcmp.eq.s32.totalorder %v55, %v286
    %vm320 = vcmp.eq.s32.totalorder %v55, %v290
    %vm321 = vcmp.eq.s32.totalorder %v56, %v286
    %vm322 = vcmp.eq.s32.totalorder %v56, %v290
    %vm323 = vcmp.eq.s32.totalorder %v57, %v286
    %vm324 = vcmp.eq.s32.totalorder %v57, %v290
    %vm325 = vcmp.eq.s32.totalorder %v58, %v286
    %vm326 = vcmp.eq.s32.totalorder %v58, %v290
    %vm327 = vcmp.eq.s32.totalorder %v59, %v286
    %vm328 = vcmp.eq.s32.totalorder %v59, %v290
    %vm329 = vcmp.eq.s32.totalorder %v60, %v286
    %vm330 = vcmp.eq.s32.totalorder %v60, %v290
    %vm331 = vcmp.eq.s32.totalorder %v61, %v286
    %vm332 = vcmp.eq.s32.totalorder %v61, %v290
    %vm333 = vcmp.eq.s32.totalorder %v62, %v286
    %vm334 = vcmp.eq.s32.totalorder %v62, %v290
    %vm335 = vcmp.eq.s32.totalorder %v63, %v286
    %vm336 = vcmp.eq.s32.totalorder %v63, %v290
    %vm337 = vcmp.eq.s32.totalorder %v64, %v286
    %vm338 = vcmp.eq.s32.totalorder %v64, %v290
    %vm339 = vcmp.eq.s32.totalorder %v65, %v286
    %vm340 = vcmp.eq.s32.totalorder %v65, %v290
    %vm341 = vcmp.eq.s32.totalorder %v66, %v286
    %vm342 = vcmp.eq.s32.totalorder %v66, %v290
    %vm343 = vcmp.eq.s32.totalorder %v67, %v286
    %vm344 = vcmp.eq.s32.totalorder %v67, %v290
    %vm345 = vcmp.eq.s32.totalorder %v68, %v286
    %vm346 = vcmp.eq.s32.totalorder %v68, %v290
    %vm347 = vcmp.eq.s32.totalorder %v69, %v286
    %vm348 = vcmp.eq.s32.totalorder %v69, %v290
    %vm349 = vcmp.eq.s32.totalorder %v70, %v286
    %vm350 = vcmp.eq.s32.totalorder %v70, %v290
    %vm351 = vcmp.eq.s32.totalorder %v71, %v286
    %vm352 = vcmp.eq.s32.totalorder %v71, %v290
    %vm353 = vcmp.eq.s32.totalorder %v72, %v286
    %vm354 = vcmp.eq.s32.totalorder %v72, %v290
    %v355 = vsel %vm291, 1.0, 0.0
    %v356 = vsel %vm292, 1.0, 0.0
    %v357 = vsel %vm293, 1.0, 0.0
    %v358 = vsel %vm294, 1.0, 0.0
    %v359 = vsel %vm295, 1.0, 0.0
    %v360 = vsel %vm296, 1.0, 0.0
    %v361 = vsel %vm297, 1.0, 0.0
    %v362 = vsel %vm298, 1.0, 0.0
    %v363 = vsel %vm299, 1.0, 0.0
    %v364 = vsel %vm300, 1.0, 0.0
    %v365 = vsel %vm301, 1.0, 0.0
    %v366 = vsel %vm302, 1.0, 0.0
    %v367 = vsel %vm303, 1.0, 0.0
    %v368 = vsel %vm304, 1.0, 0.0
    %v369 = vsel %vm305, 1.0, 0.0
    %v370 = vsel %vm306, 1.0, 0.0
    %v371 = vsel %vm307, 1.0, 0.0
    %v372 = vsel %vm308, 1.0, 0.0
    %v373 = vsel %vm309, 1.0, 0.0
    %v374 = vsel %vm310, 1.0, 0.0
    %v375 = vsel %vm311, 1.0, 0.0
    %v376 = vsel %vm312, 1.0, 0.0
    %v377 = vsel %vm313, 1.0, 0.0
    %v378 = vsel %vm314, 1.0, 0.0
    %v379 = vsel %vm315, 1.0, 0.0
    %v380 = vsel %vm316, 1.0, 0.0
    %v381 = vsel %vm317, 1.0, 0.0
    %v382 = vsel %vm318, 1.0, 0.0
    %v383 = vsel %vm319, 1.0, 0.0
    %v384 = vsel %vm320, 1.0, 0.0
    %v385 = vsel %vm321, 1.0, 0.0
    %v386 = vsel %vm322, 1.0, 0.0
    %v387 = vsel %vm323, 1.0, 0.0
    %v388 = vsel %vm324, 1.0, 0.0
    %v389 = vsel %vm325, 1.0, 0.0
    %v390 = vsel %vm326, 1.0, 0.0
    %v391 = vsel %vm327, 1.0, 0.0
    %v392 = vsel %vm328, 1.0, 0.0
    %v393 = vsel %vm329, 1.0, 0.0
    %v394 = vsel %vm330, 1.0, 0.0
    %v395 = vsel %vm331, 1.0, 0.0
    %v396 = vsel %vm332, 1.0, 0.0
    %v397 = vsel %vm333, 1.0, 0.0
    %v398 = vsel %vm334, 1.0, 0.0
    %v399 = vsel %vm335, 1.0, 0.0
    %v400 = vsel %vm336, 1.0, 0.0
    %v401 = vsel %vm337, 1.0, 0.0
    %v402 = vsel %vm338, 1.0, 0.0
    %v403 = vsel %vm339, 1.0, 0.0
    %v404 = vsel %vm340, 1.0, 0.0
    %v405 = vsel %vm341, 1.0, 0.0
    %v406 = vsel %vm342, 1.0, 0.0
    %v407 = vsel %vm343, 1.0, 0.0
    %v408 = vsel %vm344, 1.0, 0.0
    %v409 = vsel %vm345, 1.0, 0.0
    %v410 = vsel %vm346, 1.0, 0.0
    %v411 = vsel %vm347, 1.0, 0.0
    %v412 = vsel %vm348, 1.0, 0.0
    %v413 = vsel %vm349, 1.0, 0.0
    %v414 = vsel %vm350, 1.0, 0.0
    %v415 = vsel %vm351, 1.0, 0.0
    %v416 = vsel %vm352, 1.0, 0.0
    %v417 = vsel %vm353, 1.0, 0.0
    %v418 = vsel %vm354, 1.0, 0.0
    %v419 = vld [vmem:[#allocation2] sm:$0xff]
    %v420 = vld [vmem:[#allocation2 + $0x8] sm:$0xff]
    %v421 = vld [vmem:[#allocation2 + $0x10] sm:$0xff]
    %v422 = vld [vmem:[#allocation2 + $0x18] sm:$0xff]
    %v423 = vld [vmem:[#allocation2 + $0x20] sm:$0xff]
    %v424 = vld [vmem:[#allocation2 + $0x28] sm:$0xff]
    %v425 = vld [vmem:[#allocation2 + $0x30] sm:$0xff]
    %v426 = vld [vmem:[#allocation2 + $0x38] sm:$0xff]
    %427 = vmatprep.subr.mxu0 %v356
    %428 = vmatpush1.msra.mxu0 %v355
    %429 = vmatprep.subr.mxu0 %v358
    %430 = vmatpush1.msra.mxu0 %v357
    %431 = vmatprep.subr.mxu0 %v360
    %432 = vmatpush1.msra.mxu0 %v359
    %433 = vmatprep.subr.mxu0 %v362
    %434 = vmatpush1.msra.mxu0 %v361
    %435 = vmatprep.subr.mxu0 %v364
    %436 = vmatpush1.msra.mxu0 %v363
    %437 = vmatprep.subr.mxu0 %v366
    %438 = vmatpush1.msra.mxu0 %v365
    %439 = vmatprep.subr.mxu0 %v368
    %440 = vmatpush1.msra.mxu0 %v367
    %441 = vmatprep.subr.mxu0 %v370
    %442 = vmatpush1.msra.mxu0 %v369
    %443 = vmatprep.subr.mxu0 %v372
    %444 = vmatpush1.msra.mxu0 %v371
    %445 = vmatprep.subr.mxu0 %v374
    %446 = vmatpush1.msra.mxu0 %v373
    %447 = vmatprep.subr.mxu0 %v376
    %448 = vmatpush1.msra.mxu0 %v375
    %449 = vmatprep.subr.mxu0 %v378
    %450 = vmatpush1.msra.mxu0 %v377
    %451 = vmatprep.subr.mxu0 %v380
    %452 = vmatpush1.msra.mxu0 %v379
    %453 = vmatprep.subr.mxu0 %v382
    %454 = vmatpush1.msra.mxu0 %v381
    %455 = vmatprep.subr.mxu0 %v384
    %456 = vmatpush1.msra.mxu0 %v383
    %457 = vmatprep.subr.mxu0 %v386
    %458 = vmatpush1.msra.mxu0 %v385
    %459 = vmatprep.subr.mxu0 %v388
    %460 = vmatpush1.msra.mxu0 %v387
    %461 = vmatprep.subr.mxu0 %v390
    %462 = vmatpush1.msra.mxu0 %v389
    %463 = vmatprep.subr.mxu0 %v392
    %464 = vmatpush1.msra.mxu0 %v391
    %465 = vmatprep.subr.mxu0 %v394
    %466 = vmatpush1.msra.mxu0 %v393
    %467 = vmatprep.subr.mxu0 %v396
    %468 = vmatpush1.msra.mxu0 %v395
    %469 = vmatprep.subr.mxu0 %v398
    %470 = vmatpush1.msra.mxu0 %v397
    %471 = vmatprep.subr.mxu0 %v400
    %472 = vmatpush1.msra.mxu0 %v399
    %473 = vmatprep.subr.mxu0 %v402
    %474 = vmatpush1.msra.mxu0 %v401
    %475 = vmatprep.subr.mxu0 %v404
    %476 = vmatpush1.msra.mxu0 %v403
    %477 = vmatprep.subr.mxu0 %v406
    %478 = vmatpush1.msra.mxu0 %v405
    %479 = vmatprep.subr.mxu0 %v408
    %480 = vmatpush1.msra.mxu0 %v407
    %481 = vmatprep.subr.mxu0 %v410
    %482 = vmatpush1.msra.mxu0 %v409
    %483 = vmatprep.subr.mxu0 %v412
    %484 = vmatpush1.msra.mxu0 %v411
    %485 = vmatprep.subr.mxu0 %v414
    %486 = vmatpush1.msra.mxu0 %v413
    %487 = vmatprep.subr.mxu0 %v416
    %488 = vmatpush1.msra.mxu0 %v415
    %489 = vmatprep.subr.mxu0 %v418
    %490 = vmatpush1.msra.mxu0 %v417
    %491 = vmatprep.mubr.f32.mxu0 %v420
    %492 = vmatmul.mubr.f32.gmra.mrb[0].mxu0 %v419
    %v493 = vpop.f32.mrb[0].mxu0
    %v494 = vadd.f32 0.0, %v493
    %v495 = vpop.f32.mrb[0].mxu0
    %v496 = vadd.f32 0.0, %v495
    %497 = vmatprep.mubr.f32.mxu0 %v422
    %498 = vmatmul.mubr.f32.gmra.mrb[0].mxu0 %v421
    %v499 = vpop.f32.mrb[0].mxu0
    %v500 = vadd.f32 0.0, %v499
    %v501 = vpop.f32.mrb[0].mxu0
    %v502 = vadd.f32 0.0, %v501
    %503 = vmatprep.mubr.f32.mxu0 %v424
    %504 = vmatmul.mubr.f32.gmra.mrb[0].mxu0 %v423
    %v505 = vpop.f32.mrb[0].mxu0
    %v506 = vadd.f32 0.0, %v505
    %v507 = vpop.f32.mrb[0].mxu0
    %v508 = vadd.f32 0.0, %v507
    %509 = vmatprep.mubr.f32.mxu0 %v426
    %510 = vmatmul.mubr.f32.gmra.mrb[0].mxu0 %v425
    %v511 = vpop.f32.mrb[0].mxu0
    %v512 = vadd.f32 0.0, %v511
    %v513 = vpop.f32.mrb[0].mxu0
    %v514 = vadd.f32 0.0, %v513
    %515 = vdwg.mxu0
    %v516 = vadd.f32 %v494, %v506
    %v517 = vadd.f32 %v496, %v508
    %v518 = vlaneseq
    %v519 = vshrl.u32 %v518, 7
    %v520 = vsub.s32 0, %v519
    %v521 = vrot.slane %v147, %v520
    %v522 = vlaneseq
    %v523 = vshrl.u32 %v522, 7
    %v524 = vsub.s32 0, %v523
    %v525 = vrot.slane %v148, %v524
    %v526 = vmul.f32 %v516, %v521
    %v527 = vmul.f32 %v517, %v525
    %v528 = vlaneseq
    %v529 = vshrl.u32 %v528, 7
    %v530 = vsub.s32 0, %v529
    %v531 = vrot.slane %v159, %v530
    %v532 = vlaneseq
    %v533 = vshrl.u32 %v532, 7
    %v534 = vsub.s32 0, %v533
    %v535 = vrot.slane %v160, %v534
    %v536 = vmul.f32 %v516, %v531
    %v537 = vmul.f32 %v517, %v535
    %v540 = vrot.slane %v536, 4
    %v541 = vrot.slane %v537, 4
    %v544 = vadd.f32 %v526, %v540
    %v545 = vadd.f32 %v527, %v541
    %v546 = vadd.f32 %v500, %v512
    %v547 = vadd.f32 %v502, %v514
    %v548 = vlaneseq
    %v549 = vshrl.u32 %v548, 7
    %v550 = vsub.s32 0, %v549
    %v551 = vrot.slane %v173, %v550
    %v552 = vlaneseq
    %v553 = vshrl.u32 %v552, 7
    %v554 = vsub.s32 0, %v553
    %v555 = vrot.slane %v174, %v554
    %v556 = vmul.f32 %v546, %v551
    %v557 = vmul.f32 %v547, %v555
    %v558 = vadd.f32 %v544, %v556
    %v559 = vadd.f32 %v545, %v557
    %v560 = vlaneseq
    %v561 = vshrl.u32 %v560, 7
    %v562 = vsub.s32 0, %v561
    %v563 = vrot.slane %v181, %v562
    %v564 = vlaneseq
    %v565 = vshrl.u32 %v564, 7
    %v566 = vsub.s32 0, %v565
    %v567 = vrot.slane %v182, %v566
    %v568 = vmul.f32 %v546, %v563
    %v569 = vmul.f32 %v547, %v567
    %v572 = vrot.slane %v568, 4
    %v573 = vrot.slane %v569, 4
    %v576 = vadd.f32 %v558, %v572
    %v577 = vadd.f32 %v559, %v573
    %v580 = vcombine.low %v576, %v577
    %582 = vst [vmem:[#allocation8] sm:$0xff] %v580
    %s583 = scalar_lea.vmem [#allocation6], 8
    %v584 = vld [vmem:[%s583] sm:$0xff]
    %s585 = scalar_lea.vmem [#allocation3], 4
    %v586 = vld [vmem:[%s585] sm:$0xf]
    %v588 = vlaneseq
    %v589 = vshrl.u32 %v588, 7
    %v590 = vsub.s32 0, %v589
    %v591 = vrot.slane %v586, %v590
    %v592 = vlaneseq
    %v593 = vshrl.u32 %v592, 7
    %v594 = vsub.s32 2, %v593
    %v595 = vrot.slane %v586, %v594
    %v598 = vadd.f32 %v78, %v591
    %v599 = vadd.f32 %v79, %v595
    %v600 = vlaneseq
    %v601 = vshrl.u32 %v600, 7
    %v602 = vsub.s32 1, %v601
    %v603 = vrot.slane %v586, %v602
    %v604 = vlaneseq
    %v605 = vshrl.u32 %v604, 7
    %v606 = vsub.s32 3, %v605
    %v607 = vrot.slane %v586, %v606
    %v610 = vadd.f32 %v82, %v603
    %v611 = vadd.f32 %v83, %v607
    %v612 = vfloor.f32 %v598
    %v613 = vfloor.f32 %v599
    %v614 = vfloor.f32 %v610
    %v615 = vfloor.f32 %v611
    %v616 = vsub.f32 %v598, %v612
    %v617 = vsub.f32 %v599, %v613
    %v618 = vsub.f32 1.0, %v616
    %v619 = vsub.f32 1.0, %v617
    %v620 = vsub.f32 %v610, %v614
    %v621 = vsub.f32 %v611, %v615
    %v622 = vsub.f32 1.0, %v620
    %v623 = vsub.f32 1.0, %v621
    %v624 = vcvt.f32.s32.to.zero.pseudo %v612
    %v625 = vcvt.f32.s32.to.zero.pseudo %v613
    %v626 = vcvt.f32.s32.to.zero.pseudo %v614
    %v627 = vcvt.f32.s32.to.zero.pseudo %v615
    %v628 = vadd.s32 %v624, 1
    %v629 = vadd.s32 %v625, 1
    %v630 = vadd.s32 %v626, 1
    %v631 = vadd.s32 %v627, 1
    %v632 = vmul.f32 %v618, %v622
    %v633 = vmul.f32 %v619, %v623
    %vm634 = vcmp.ge.s32.totalorder %v624, 0
    %vm635 = vcmp.ge.s32.totalorder %v625, 0
    %vm636 = vcmp.le.s32.totalorder %v624, 15
    %vm637 = vcmp.le.s32.totalorder %v625, 15
    %vm638 = vmand %vm634, %vm636
    %vm639 = vmand %vm635, %vm637
    %vm640 = vcmp.ge.s32.totalorder %v626, 0
    %vm641 = vcmp.ge.s32.totalorder %v627, 0
    %vm642 = vmand %vm638, %vm640
    %vm643 = vmand %vm639, %vm641
    %vm644 = vcmp.le.s32.totalorder %v626, 15
    %vm645 = vcmp.le.s32.totalorder %v627, 15
    %vm646 = vmand %vm642, %vm644
    %vm647 = vmand %vm643, %vm645
    %v648 = vsel %vm646, %v632, 0.0
    %v649 = vsel %vm647, %v633, 0.0
    %v650 = vmul.f32 %v618, %v620
    %v651 = vmul.f32 %v619, %v621
    %vm652 = vcmp.ge.s32.totalorder %v630, 0
    %vm653 = vcmp.ge.s32.totalorder %v631, 0
    %vm654 = vmand %vm638, %vm652
    %vm655 = vmand %vm639, %vm653
    %vm656 = vcmp.le.s32.totalorder %v630, 15
    %vm657 = vcmp.le.s32.totalorder %v631, 15
    %vm658 = vmand %vm654, %vm656
    %vm659 = vmand %vm655, %vm657
    %v660 = vsel %vm658, %v650, 0.0
    %v661 = vsel %vm659, %v651, 0.0
    %v662 = vmul.f32 %v616, %v622
    %v663 = vmul.f32 %v617, %v623
    %vm664 = vcmp.ge.s32.totalorder %v628, 0
    %vm665 = vcmp.ge.s32.totalorder %v629, 0
    %vm666 = vcmp.le.s32.totalorder %v628, 15
    %vm667 = vcmp.le.s32.totalorder %v629, 15
    %vm668 = vmand %vm664, %vm666
    %vm669 = vmand %vm665, %vm667
    %vm670 = vmand %vm668, %vm640
    %vm671 = vmand %vm669, %vm641
    %vm672 = vmand %vm670, %vm644
    %vm673 = vmand %vm671, %vm645
    %v674 = vsel %vm672, %v662, 0.0
    %v675 = vsel %vm673, %v663, 0.0
    %v676 = vmul.f32 %v616, %v620
    %v677 = vmul.f32 %v617, %v621
    %vm678 = vmand %vm668, %vm652
    %vm679 = vmand %vm669, %vm653
    %vm680 = vmand %vm678, %vm656
    %vm681 = vmand %vm679, %vm657
    %v682 = vsel %vm680, %v676, 0.0
    %v683 = vsel %vm681, %v677, 0.0
    %v684 = vmul.u32 %v624, 16
    %v685 = vmul.u32 %v625, 16
    %v686 = vadd.s32 %v684, %v626
    %v687 = vadd.s32 %v685, %v627
    %v688 = vand.u32 %v686, 255
    %v689 = vand.u32 %v687, 255
    %v691 = vcombine.high %v584, %v584
    %693 = vrot.lane.b32.xlu0 %v584, 127
    %v694 = vpop.permute.xlu0 %693
    %695 = vrot.lane.b32.xlu0 %v691, 127
    %v696 = vpop.permute.xlu0 %695
    %v697 = vsel %vm196, %v694, %v696
    %v698 = vsel %vm196, %v696, %v694
    %699 = vrot.lane.b32.xlu0 %v584, 112
    %v700 = vpop.permute.xlu0 %699
    %701 = vrot.lane.b32.xlu0 %v691, 112
    %v702 = vpop.permute.xlu0 %701
    %v703 = vsel %vm203, %v700, %v702
    %v704 = vsel %vm203, %v702, %v700
    %705 = vrot.lane.b32.xlu0 %v584, 111
    %v706 = vpop.permute.xlu0 %705
    %707 = vrot.lane.b32.xlu0 %v691, 111
    %v708 = vpop.permute.xlu0 %707
    %v709 = vsel %vm210, %v706, %v708
    %v710 = vsel %vm210, %v708, %v706
    %v711 = vpack.c.bf16 %v584, %v584
    %v712 = vpack.c.bf16 %v691, %v691
    %v713 = vunpack.c.l.bf16 %v711
    %v714 = vunpack.c.l.bf16 %v712
    %715 = vst [vmem:[#allocation2] sm:$0xf] %v713
    %716 = vst [vmem:[#allocation2 + $0x8] sm:$0xf] %v714
    %v719 = vcombine.low %v713, %v714
    %v721 = vsub.f32 %v584, %v719
    %v723 = vcombine.high %v721, %v721
    %725 = vst [vmem:[#allocation2 + $0x20] sm:$0xf] %v721
    %726 = vst [vmem:[#allocation2 + $0x28] sm:$0xf] %v723
    %v727 = vpack.c.bf16 %v697, %v697
    %v728 = vpack.c.bf16 %v698, %v698
    %v729 = vunpack.c.l.bf16 %v727
    %v730 = vunpack.c.l.bf16 %v728
    %v733 = vrot.slane %v729, 4
    %v734 = vrot.slane %v730, 4
    %737 = vst [vmem:[#allocation2] sm:$0xf0] %v733
    %738 = vst [vmem:[#allocation2 + $0x8] sm:$0xf0] %v734
    %v739 = vsub.f32 %v697, %v729
    %v740 = vsub.f32 %v698, %v730
    %v743 = vrot.slane %v739, 4
    %v744 = vrot.slane %v740, 4
    %747 = vst [vmem:[#allocation2 + $0x20] sm:$0xf0] %v743
    %748 = vst [vmem:[#allocation2 + $0x28] sm:$0xf0] %v744
    %v749 = vpack.c.bf16 %v703, %v703
    %v750 = vpack.c.bf16 %v704, %v704
    %v751 = vunpack.c.l.bf16 %v749
    %v752 = vunpack.c.l.bf16 %v750
    %753 = vst [vmem:[#allocation2 + $0x10] sm:$0xf] %v751
    %754 = vst [vmem:[#allocation2 + $0x18] sm:$0xf] %v752
    %v755 = vsub.f32 %v703, %v751
    %v756 = vsub.f32 %v704, %v752
    %757 = vst [vmem:[#allocation2 + $0x30] sm:$0xf] %v755
    %758 = vst [vmem:[#allocation2 + $0x38] sm:$0xf] %v756
    %v759 = vpack.c.bf16 %v709, %v709
    %v760 = vpack.c.bf16 %v710, %v710
    %v761 = vunpack.c.l.bf16 %v759
    %v762 = vunpack.c.l.bf16 %v760
    %v765 = vrot.slane %v761, 4
    %v766 = vrot.slane %v762, 4
    %769 = vst [vmem:[#allocation2 + $0x10] sm:$0xf0] %v765
    %770 = vst [vmem:[#allocation2 + $0x18] sm:$0xf0] %v766
    %v771 = vsub.f32 %v709, %v761
    %v772 = vsub.f32 %v710, %v762
    %v775 = vrot.slane %v771, 4
    %v776 = vrot.slane %v772, 4
    %779 = vst [vmem:[#allocation2 + $0x30] sm:$0xf0] %v775
    %780 = vst [vmem:[#allocation2 + $0x38] sm:$0xf0] %v776
    %v781 = vlaneseq
    %v782 = vshrl.u32 %v781, 7
    %v783 = vsub.s32 0, %v782
    %v784 = vrot.slane %v688, %v783
    %v785 = vlaneseq
    %v786 = vshrl.u32 %v785, 7
    %v787 = vsub.s32 0, %v786
    %v788 = vrot.slane %v689, %v787
    %vm789 = vcmp.eq.s32.totalorder %v41, %v784
    %vm790 = vcmp.eq.s32.totalorder %v41, %v788
    %vm791 = vcmp.eq.s32.totalorder %v42, %v784
    %vm792 = vcmp.eq.s32.totalorder %v42, %v788
    %vm793 = vcmp.eq.s32.totalorder %v43, %v784
    %vm794 = vcmp.eq.s32.totalorder %v43, %v788
    %vm795 = vcmp.eq.s32.totalorder %v44, %v784
    %vm796 = vcmp.eq.s32.totalorder %v44, %v788
    %vm797 = vcmp.eq.s32.totalorder %v45, %v784
    %vm798 = vcmp.eq.s32.totalorder %v45, %v788
    %vm799 = vcmp.eq.s32.totalorder %v46, %v784
    %vm800 = vcmp.eq.s32.totalorder %v46, %v788
    %vm801 = vcmp.eq.s32.totalorder %v47, %v784
    %vm802 = vcmp.eq.s32.totalorder %v47, %v788
    %vm803 = vcmp.eq.s32.totalorder %v48, %v784
    %vm804 = vcmp.eq.s32.totalorder %v48, %v788
    %vm805 = vcmp.eq.s32.totalorder %v49, %v784
    %vm806 = vcmp.eq.s32.totalorder %v49, %v788
    %vm807 = vcmp.eq.s32.totalorder %v50, %v784
    %vm808 = vcmp.eq.s32.totalorder %v50, %v788
    %vm809 = vcmp.eq.s32.totalorder %v51, %v784
    %vm810 = vcmp.eq.s32.totalorder %v51, %v788
    %vm811 = vcmp.eq.s32.totalorder %v52, %v784
    %vm812 = vcmp.eq.s32.totalorder %v52, %v788
    %vm813 = vcmp.eq.s32.totalorder %v53, %v784
    %vm814 = vcmp.eq.s32.totalorder %v53, %v788
    %vm815 = vcmp.eq.s32.totalorder %v54, %v784
    %vm816 = vcmp.eq.s32.totalorder %v54, %v788
    %vm817 = vcmp.eq.s32.totalorder %v55, %v784
    %vm818 = vcmp.eq.s32.totalorder %v55, %v788
    %vm819 = vcmp.eq.s32.totalorder %v56, %v784
    %vm820 = vcmp.eq.s32.totalorder %v56, %v788
    %vm821 = vcmp.eq.s32.totalorder %v57, %v784
    %vm822 = vcmp.eq.s32.totalorder %v57, %v788
    %vm823 = vcmp.eq.s32.totalorder %v58, %v784
    %vm824 = vcmp.eq.s32.totalorder %v58, %v788
    %vm825 = vcmp.eq.s32.totalorder %v59, %v784
    %vm826 = vcmp.eq.s32.totalorder %v59, %v788
    %vm827 = vcmp.eq.s32.totalorder %v60, %v784
    %vm828 = vcmp.eq.s32.totalorder %v60, %v788
    %vm829 = vcmp.eq.s32.totalorder %v61, %v784
    %vm830 = vcmp.eq.s32.totalorder %v61, %v788
    %vm831 = vcmp.eq.s32.totalorder %v62, %v784
    %vm832 = vcmp.eq.s32.totalorder %v62, %v788
    %vm833 = vcmp.eq.s32.totalorder %v63, %v784
    %vm834 = vcmp.eq.s32.totalorder %v63, %v788
    %vm835 = vcmp.eq.s32.totalorder %v64, %v784
    %vm836 = vcmp.eq.s32.totalorder %v64, %v788
    %vm837 = vcmp.eq.s32.totalorder %v65, %v784
    %vm838 = vcmp.eq.s32.totalorder %v65, %v788
    %vm839 = vcmp.eq.s32.totalorder %v66, %v784
    %vm840 = vcmp.eq.s32.totalorder %v66, %v788
    %vm841 = vcmp.eq.s32.totalorder %v67, %v784
    %vm842 = vcmp.eq.s32.totalorder %v67, %v788
    %vm843 = vcmp.eq.s32.totalorder %v68, %v784
    %vm844 = vcmp.eq.s32.totalorder %v68, %v788
    %vm845 = vcmp.eq.s32.totalorder %v69, %v784
    %vm846 = vcmp.eq.s32.totalorder %v69, %v788
    %vm847 = vcmp.eq.s32.totalorder %v70, %v784
    %vm848 = vcmp.eq.s32.totalorder %v70, %v788
    %vm849 = vcmp.eq.s32.totalorder %v71, %v784
    %vm850 = vcmp.eq.s32.totalorder %v71, %v788
    %vm851 = vcmp.eq.s32.totalorder %v72, %v784
    %vm852 = vcmp.eq.s32.totalorder %v72, %v788
    %v853 = vsel %vm789, 1.0, 0.0
    %v854 = vsel %vm790, 1.0, 0.0
    %v855 = vsel %vm791, 1.0, 0.0
    %v856 = vsel %vm792, 1.0, 0.0
    %v857 = vsel %vm793, 1.0, 0.0
    %v858 = vsel %vm794, 1.0, 0.0
    %v859 = vsel %vm795, 1.0, 0.0
    %v860 = vsel %vm796, 1.0, 0.0
    %v861 = vsel %vm797, 1.0, 0.0
    %v862 = vsel %vm798, 1.0, 0.0
    %v863 = vsel %vm799, 1.0, 0.0
    %v864 = vsel %vm800, 1.0, 0.0
    %v865 = vsel %vm801, 1.0, 0.0
    %v866 = vsel %vm802, 1.0, 0.0
    %v867 = vsel %vm803, 1.0, 0.0
    %v868 = vsel %vm804, 1.0, 0.0
    %v869 = vsel %vm805, 1.0, 0.0
    %v870 = vsel %vm806, 1.0, 0.0
    %v871 = vsel %vm807, 1.0, 0.0
    %v872 = vsel %vm808, 1.0, 0.0
    %v873 = vsel %vm809, 1.0, 0.0
    %v874 = vsel %vm810, 1.0, 0.0
    %v875 = vsel %vm811, 1.0, 0.0
    %v876 = vsel %vm812, 1.0, 0.0
    %v877 = vsel %vm813, 1.0, 0.0
    %v878 = vsel %vm814, 1.0, 0.0
    %v879 = vsel %vm815, 1.0, 0.0
    %v880 = vsel %vm816, 1.0, 0.0
    %v881 = vsel %vm817, 1.0, 0.0
    %v882 = vsel %vm818, 1.0, 0.0
    %v883 = vsel %vm819, 1.0, 0.0
    %v884 = vsel %vm820, 1.0, 0.0
    %v885 = vsel %vm821, 1.0, 0.0
    %v886 = vsel %vm822, 1.0, 0.0
    %v887 = vsel %vm823, 1.0, 0.0
    %v888 = vsel %vm824, 1.0, 0.0
    %v889 = vsel %vm825, 1.0, 0.0
    %v890 = vsel %vm826, 1.0, 0.0
    %v891 = vsel %vm827, 1.0, 0.0
    %v892 = vsel %vm828, 1.0, 0.0
    %v893 = vsel %vm829, 1.0, 0.0
    %v894 = vsel %vm830, 1.0, 0.0
    %v895 = vsel %vm831, 1.0, 0.0
    %v896 = vsel %vm832, 1.0, 0.0
    %v897 = vsel %vm833, 1.0, 0.0
    %v898 = vsel %vm834, 1.0, 0.0
    %v899 = vsel %vm835, 1.0, 0.0
    %v900 = vsel %vm836, 1.0, 0.0
    %v901 = vsel %vm837, 1.0, 0.0
    %v902 = vsel %vm838, 1.0, 0.0
    %v903 = vsel %vm839, 1.0, 0.0
    %v904 = vsel %vm840, 1.0, 0.0
    %v905 = vsel %vm841, 1.0, 0.0
    %v906 = vsel %vm842, 1.0, 0.0
    %v907 = vsel %vm843, 1.0, 0.0
    %v908 = vsel %vm844, 1.0, 0.0
    %v909 = vsel %vm845, 1.0, 0.0
    %v910 = vsel %vm846, 1.0, 0.0
    %v911 = vsel %vm847, 1.0, 0.0
    %v912 = vsel %vm848, 1.0, 0.0
    %v913 = vsel %vm849, 1.0, 0.0
    %v914 = vsel %vm850, 1.0, 0.0
    %v915 = vsel %vm851, 1.0, 0.0
    %v916 = vsel %vm852, 1.0, 0.0
    %v917 = vld [vmem:[#allocation2] sm:$0xff]
    %v918 = vld [vmem:[#allocation2 + $0x8] sm:$0xff]
    %v919 = vld [vmem:[#allocation2 + $0x10] sm:$0xff]
    %v920 = vld [vmem:[#allocation2 + $0x18] sm:$0xff]
    %v921 = vld [vmem:[#allocation2 + $0x20] sm:$0xff]
    %v922 = vld [vmem:[#allocation2 + $0x28] sm:$0xff]
    %v923 = vld [vmem:[#allocation2 + $0x30] sm:$0xff]
    %v924 = vld [vmem:[#allocation2 + $0x38] sm:$0xff]
    %925 = vmatprep.subr.mxu0 %v854
    %926 = vmatpush1.msra.mxu0 %v853
    %927 = vmatprep.subr.mxu0 %v856
    %928 = vmatpush1.msra.mxu0 %v855
    %929 = vmatprep.subr.mxu0 %v858
    %930 = vmatpush1.msra.mxu0 %v857
    %931 = vmatprep.subr.mxu0 %v860
    %932 = vmatpush1.msra.mxu0 %v859
    %933 = vmatprep.subr.mxu0 %v862
    %934 = vmatpush1.msra.mxu0 %v861
    %935 = vmatprep.subr.mxu0 %v864
    %936 = vmatpush1.msra.mxu0 %v863
    %937 = vmatprep.subr.mxu0 %v866
    %938 = vmatpush1.msra.mxu0 %v865
    %939 = vmatprep.subr.mxu0 %v868
    %940 = vmatpush1.msra.mxu0 %v867
    %941 = vmatprep.subr.mxu0 %v870
    %942 = vmatpush1.msra.mxu0 %v869
    %943 = vmatprep.subr.mxu0 %v872
    %944 = vmatpush1.msra.mxu0 %v871
    %945 = vmatprep.subr.mxu0 %v874
    %946 = vmatpush1.msra.mxu0 %v873
    %947 = vmatprep.subr.mxu0 %v876
    %948 = vmatpush1.msra.mxu0 %v875
    %949 = vmatprep.subr.mxu0 %v878
    %950 = vmatpush1.msra.mxu0 %v877
    %951 = vmatprep.subr.mxu0 %v880
    %952 = vmatpush1.msra.mxu0 %v879
    %953 = vmatprep.subr.mxu0 %v882
    %954 = vmatpush1.msra.mxu0 %v881
    %955 = vmatprep.subr.mxu0 %v884
    %956 = vmatpush1.msra.mxu0 %v883
    %957 = vmatprep.subr.mxu0 %v886
    %958 = vmatpush1.msra.mxu0 %v885
    %959 = vmatprep.subr.mxu0 %v888
    %960 = vmatpush1.msra.mxu0 %v887
    %961 = vmatprep.subr.mxu0 %v890
    %962 = vmatpush1.msra.mxu0 %v889
    %963 = vmatprep.subr.mxu0 %v892
    %964 = vmatpush1.msra.mxu0 %v891
    %965 = vmatprep.subr.mxu0 %v894
    %966 = vmatpush1.msra.mxu0 %v893
    %967 = vmatprep.subr.mxu0 %v896
    %968 = vmatpush1.msra.mxu0 %v895
    %969 = vmatprep.subr.mxu0 %v898
    %970 = vmatpush1.msra.mxu0 %v897
    %971 = vmatprep.subr.mxu0 %v900
    %972 = vmatpush1.msra.mxu0 %v899
    %973 = vmatprep.subr.mxu0 %v902
    %974 = vmatpush1.msra.mxu0 %v901
    %975 = vmatprep.subr.mxu0 %v904
    %976 = vmatpush1.msra.mxu0 %v903
    %977 = vmatprep.subr.mxu0 %v906
    %978 = vmatpush1.msra.mxu0 %v905
    %979 = vmatprep.subr.mxu0 %v908
    %980 = vmatpush1.msra.mxu0 %v907
    %981 = vmatprep.subr.mxu0 %v910
    %982 = vmatpush1.msra.mxu0 %v909
    %983 = vmatprep.subr.mxu0 %v912
    %984 = vmatpush1.msra.mxu0 %v911
    %985 = vmatprep.subr.mxu0 %v914
    %986 = vmatpush1.msra.mxu0 %v913
    %987 = vmatprep.subr.mxu0 %v916
    %988 = vmatpush1.msra.mxu0 %v915
    %989 = vmatprep.mubr.f32.mxu0 %v918
    %990 = vmatmul.mubr.f32.gmra.mrb[0].mxu0 %v917
    %v991 = vpop.f32.mrb[0].mxu0
    %v992 = vadd.f32 0.0, %v991
    %v993 = vpop.f32.mrb[0].mxu0
    %v994 = vadd.f32 0.0, %v993
    %995 = vmatprep.mubr.f32.mxu0 %v920
    %996 = vmatmul.mubr.f32.gmra.mrb[0].mxu0 %v919
    %v997 = vpop.f32.mrb[0].mxu0
    %v998 = vadd.f32 0.0, %v997
    %v999 = vpop.f32.mrb[0].mxu0
    %v1000 = vadd.f32 0.0, %v999
    %1001 = vmatprep.mubr.f32.mxu0 %v922
    %1002 = vmatmul.mubr.f32.gmra.mrb[0].mxu0 %v921
    %v1003 = vpop.f32.mrb[0].mxu0
    %v1004 = vadd.f32 0.0, %v1003
    %v1005 = vpop.f32.mrb[0].mxu0
    %v1006 = vadd.f32 0.0, %v1005
    %1007 = vmatprep.mubr.f32.mxu0 %v924
    %1008 = vmatmul.mubr.f32.gmra.mrb[0].mxu0 %v923
    %v1009 = vpop.f32.mrb[0].mxu0
    %v1010 = vadd.f32 0.0, %v1009
    %v1011 = vpop.f32.mrb[0].mxu0
    %v1012 = vadd.f32 0.0, %v1011
    %1013 = vdwg.mxu0
    %v1014 = vadd.f32 %v992, %v1004
    %v1015 = vadd.f32 %v994, %v1006
    %v1016 = vlaneseq
    %v1017 = vshrl.u32 %v1016, 7
    %v1018 = vsub.s32 0, %v1017
    %v1019 = vrot.slane %v648, %v1018
    %v1020 = vlaneseq
    %v1021 = vshrl.u32 %v1020, 7
    %v1022 = vsub.s32 0, %v1021
    %v1023 = vrot.slane %v649, %v1022
    %v1024 = vmul.f32 %v1014, %v1019
    %v1025 = vmul.f32 %v1015, %v1023
    %v1026 = vlaneseq
    %v1027 = vshrl.u32 %v1026, 7
    %v1028 = vsub.s32 0, %v1027
    %v1029 = vrot.slane %v660, %v1028
    %v1030 = vlaneseq
    %v1031 = vshrl.u32 %v1030, 7
    %v1032 = vsub.s32 0, %v1031
    %v1033 = vrot.slane %v661, %v1032
    %v1034 = vmul.f32 %v1014, %v1029
    %v1035 = vmul.f32 %v1015, %v1033
    %v1038 = vrot.slane %v1034, 4
    %v1039 = vrot.slane %v1035, 4
    %v1042 = vadd.f32 %v1024, %v1038
    %v1043 = vadd.f32 %v1025, %v1039
    %v1044 = vadd.f32 %v998, %v1010
    %v1045 = vadd.f32 %v1000, %v1012
    %v1046 = vlaneseq
    %v1047 = vshrl.u32 %v1046, 7
    %v1048 = vsub.s32 0, %v1047
    %v1049 = vrot.slane %v674, %v1048
    %v1050 = vlaneseq
    %v1051 = vshrl.u32 %v1050, 7
    %v1052 = vsub.s32 0, %v1051
    %v1053 = vrot.slane %v675, %v1052
    %v1054 = vmul.f32 %v1044, %v1049
    %v1055 = vmul.f32 %v1045, %v1053
    %v1056 = vadd.f32 %v1042, %v1054
    %v1057 = vadd.f32 %v1043, %v1055
    %v1058 = vlaneseq
    %v1059 = vshrl.u32 %v1058, 7
    %v1060 = vsub.s32 0, %v1059
    %v1061 = vrot.slane %v682, %v1060
    %v1062 = vlaneseq
    %v1063 = vshrl.u32 %v1062, 7
    %v1064 = vsub.s32 0, %v1063
    %v1065 = vrot.slane %v683, %v1064
    %v1066 = vmul.f32 %v1044, %v1061
    %v1067 = vmul.f32 %v1045, %v1065
    %v1070 = vrot.slane %v1066, 4
    %v1071 = vrot.slane %v1067, 4
    %v1074 = vadd.f32 %v1056, %v1070
    %v1075 = vadd.f32 %v1057, %v1071
    %v1078 = vcombine.low %v1074, %v1075
    %s1080 = scalar_lea.vmem [#allocation8], 8
    %1081 = vst [vmem:[%s1080] sm:$0xff] %v1078
    // Predicated region
    $region18: #{tpu_custom_call.1} parent=1 // pred_check
      _
    $region19: #{tpu_custom_call.1} parent=1 // pred_check_branch
      %1083 = sbr.rel (0) target = $region21
    $region20: #{tpu_custom_call.1} parent=1 // pred_region
      %s1085 = ssub.s32 256, 256
      %1086 = vsyncadd [#allocation5], %s1085
      %s1087 = sshll.u32 [#allocation8], 4
      %s1088 = int_to_ptr.vmem [resolvable:$true] %s1087
      %1093 = dma.vmem_to_hbm [thread:$0]  %s1088, 256, %s2, [#allocation5], 128, 128, 8
    $region21: #{tpu_custom_call.1} parent=1 // pred_fallthru
      _
    // Predicated region
    $region22: #{tpu_custom_call.1} parent=1 // pred_check
      _
    $region23: #{tpu_custom_call.1} parent=1 // pred_check_branch
      %1095 = sbr.rel (0) target = $region25
    $region24: #{tpu_custom_call.1} parent=1 // pred_region
      %1096 = dma.done [#allocation5], 256
    $region25: #{tpu_custom_call.1} parent=1 // pred_fallthru
      _
    %1097 = vsyncpa [#allocation4], 1
    %1098 = vsyncpa [#allocation7], 1
    %1099 = vsyncpa [#allocation5], 1

</llo_original>
